<compile_context>
chip_gen: v5e
topology: v5e:2x2
jax: 0.10.0
libtpu: 0.0.40
codegen_flags: <defaults>
</compile_context>

<pallas_src>
import numpy as np
import jax
import jax.numpy as jnp
from jax import lax
from jax.experimental import pallas as pl
from jax.experimental.pallas import tpu as pltpu


# -----------------------------------------------------------------------------
# Single fused kernel: one batch element per grid step.
# Activation layouts inside the kernel:
#   conv1 slab a1 : (24, 240)  lane = w*10 + c   (w < 24, c < 10)
#   pooled1  p1w  : (23, 230)  valid value p1[c,i,j] at [2*i, 20*j + c]
#   conv2 slab a2 : (15, 160)  valid value y2[c,h,w] at [2*h, 20*w + c]
#   pooled2  p2w  : (13, 140)  valid value p2[c,i,j] at [4*i, 40*j + c]
#   feature       : (1, 320)   lane-dense NHWC flatten (i, j, c)
# -----------------------------------------------------------------------------
def _convnet_kernel(x_ref, b1m_ref, b1v_ref, b2m_ref, b2v_ref,
                    wf1_ref, bf1_ref, wf2_ref, bf2_ref, o_ref, feat_ref):
    # ---- conv1 (5x5, 1->10): 5 banded GEMMs over the W axis ----------------
    acc1 = jnp.dot(x_ref[0, 0, 0:24, :], b1m_ref[0],
                   preferred_element_type=jnp.float32)
    for kh in range(1, 5):
        acc1 = acc1 + jnp.dot(x_ref[0, 0, kh:kh + 24, :], b1m_ref[kh],
                              preferred_element_type=jnp.float32)
    a1 = jnp.maximum(acc1 + b1v_ref[...], 0.0)               # (24, 240), ReLU
    # (ReLU before pool == torch's relu(max_pool(conv)) by monotonicity.)

    # ---- 2x2 max-pool #1, "fat": stride-2 selection deferred to conv2 ------
    p1h = jnp.maximum(a1[0:23, :], a1[1:24, :])               # h-direction
    p1w = jnp.maximum(p1h[:, 0:230], p1h[:, 10:240])          # w-direction

    # ---- conv2 (5x5, 10->20): 5 banded GEMMs (zero rows skip junk lanes) ---
    acc2 = jnp.dot(p1w[0:15, :], b2m_ref[0],
                   preferred_element_type=jnp.float32)
    for kh in range(1, 5):
        acc2 = acc2 + jnp.dot(p1w[2 * kh:2 * kh + 15, :], b2m_ref[kh],
                              preferred_element_type=jnp.float32)
    a2 = jnp.maximum(acc2 + b2v_ref[...], 0.0)                # (15, 160), ReLU

    # ---- 2x2 max-pool #2 ----------------------------------------------------
    p2h = jnp.maximum(a2[0:13, :], a2[2:15, :])               # (13, 160)
    p2w = jnp.maximum(p2h[:, 0:140], p2h[:, 20:160])          # (13, 140)

    # ---- lane-dense 320-wide feature row (NHWC flatten; torch's NCHW order
    #      is folded into fc1's weight at init) ------------------------------
    for i in range(4):
        for j in range(4):
            base = 80 * i + 20 * j
            feat_ref[:, base:base + 20] = p2w[4 * i:4 * i + 1,
                                              40 * j:40 * j + 20]

    # ---- classifier head: fc1 + ReLU + fc2 + log_softmax -------------------
    # TODO(synk): nn.Dropout2d / F.dropout run as identity (inference mode).
    h = jnp.maximum(
        jnp.dot(feat_ref[...], wf1_ref[...],
                preferred_element_type=jnp.float32) + bf1_ref[...], 0.0)
    y = jnp.dot(h, wf2_ref[...],
                preferred_element_type=jnp.float32) + bf2_ref[...]
    m = jnp.max(y, axis=-1, keepdims=True)
    lse = jnp.log(jnp.sum(jnp.exp(y - m), axis=-1, keepdims=True)) + m
    o_ref[0] = (y - lse).astype(o_ref.dtype)


# -----------------------------------------------------------------------------
# Forward pass: accepts the PyTorch NCHW input layout, single pallas_call.
# -----------------------------------------------------------------------------
def convnet_forward(params, x_nchw):
    N = x_nchw.shape[0]
    out = pl.pallas_call(
        _convnet_kernel,
        out_shape=jax.ShapeDtypeStruct((N, 1, 10), jnp.float32),
        grid=(N,),
        in_specs=[
            pl.BlockSpec((1, 1, 28, 28), lambda n: (n, 0, 0, 0)),   # image
            pl.BlockSpec((5, 28, 240), lambda n: (0, 0, 0)),        # conv1 band
            pl.BlockSpec((1, 240), lambda n: (0, 0)),               # bias1 tiled
            pl.BlockSpec((5, 230, 160), lambda n: (0, 0, 0)),       # conv2 band
            pl.BlockSpec((1, 160), lambda n: (0, 0)),               # bias2 tiled
            pl.BlockSpec((320, 50), lambda n: (0, 0)),              # fc1 (hwc rows)
            pl.BlockSpec((1, 50), lambda n: (0, 0)),
            pl.BlockSpec((50, 10), lambda n: (0, 0)),               # fc2
            pl.BlockSpec((1, 10), lambda n: (0, 0)),
        ],
        out_specs=pl.BlockSpec((1, 1, 10), lambda n: (n, 0, 0)),
        scratch_shapes=[pltpu.VMEM((1, 320), jnp.float32)],
        compiler_params=pltpu.CompilerParams(
            dimension_semantics=("parallel",)),   # v7x: both TCs; no-op v5e/v6e
    )(x_nchw, params["B1"], params["b1t"], params["B2"], params["b2t"],
      params["w_fc1_hwc"], params["b_fc1_2d"], params["w_fc2"],
      params["b_fc2_2d"])
    return out.reshape(N, 10)


# -----------------------------------------------------------------------------
# Deterministic synthetic parameters + host-side (init-time) weight transforms.
# -----------------------------------------------------------------------------
def init_params(key):
    ks = jax.random.split(key, 8)
    w_conv1 = jax.random.normal(ks[0], (5, 5, 1, 10), jnp.float32) * np.sqrt(2.0 / 25)
    b_conv1 = jax.random.normal(ks[1], (10,), jnp.float32) * 0.05
    w_conv2 = jax.random.normal(ks[2], (5, 5, 10, 20), jnp.float32) * np.sqrt(2.0 / 250)
    b_conv2 = jax.random.normal(ks[3], (20,), jnp.float32) * 0.05
    # fc1 weight stored in torch row order: row index = c*16 + h*4 + w.
    w_fc1_t = jax.random.normal(ks[4], (320, 50), jnp.float32) * np.sqrt(2.0 / 320)
    b_fc1 = jax.random.normal(ks[5], (50,), jnp.float32) * 0.05
    w_fc2 = jax.random.normal(ks[6], (50, 10), jnp.float32) * np.sqrt(2.0 / 50)
    b_fc2 = jax.random.normal(ks[7], (10,), jnp.float32) * 0.05

    w1 = np.asarray(w_conv1)
    w2 = np.asarray(w_conv2)

    # Banded (Toeplitz) conv1 weight: B1[kh, u, w*10 + c] = w1[kh, u-w, 0, c]
    # for 0 <= u-w < 5, so  conv1 = sum_kh x[kh:kh+24, :] @ B1[kh].
    B1 = np.zeros((5, 28, 240), np.float32)
    for kh in range(5):
        for w in range(24):
            for kw in range(5):
                B1[kh, w + kw, w * 10:(w + 1) * 10] = w1[kh, kw, 0, :]

    # Banded conv2 weight acting on the pooled slab (input lane u = 20*wi + ci;
    # odd-w junk lanes get all-zero rows, which also performs the stride-2
    # down-selection of pool #1 in the w direction):
    #   B2[kh, 20*(wo+kw) + ci, wo*20 + co] = w2[kh, kw, ci, co].
    B2 = np.zeros((5, 230, 160), np.float32)
    for kh in range(5):
        for wo in range(8):
            for kw in range(5):
                u0 = 20 * (wo + kw)
                B2[kh, u0:u0 + 10, wo * 20:(wo + 1) * 20] = w2[kh, kw, :, :]

    b1t = np.tile(np.asarray(b_conv1), 24).reshape(1, 240)   # lane = w*10 + c
    b2t = np.tile(np.asarray(b_conv2), 8).reshape(1, 160)    # lane = w*20 + c

    # Fold the torch NCHW flatten into fc1: permute rows to NHWC (i, j, c).
    w_fc1_hwc = jnp.transpose(
        w_fc1_t.reshape(20, 4, 4, 50), (1, 2, 0, 3)).reshape(320, 50)

    return {
        # raw parameters (used by the pure-JAX reference)
        "w_conv1": w_conv1, "b_conv1": b_conv1,
        "w_conv2": w_conv2, "b_conv2": b_conv2,
        "w_fc1_t": w_fc1_t, "b_fc1": b_fc1,
        "w_fc2": w_fc2, "b_fc2": b_fc2,
        # kernel-side derived parameters (built once at init, host-side)
        "B1": jnp.asarray(B1), "b1t": jnp.asarray(b1t),
        "B2": jnp.asarray(B2), "b2t": jnp.asarray(b2t),
        "w_fc1_hwc": w_fc1_hwc,
        "b_fc1_2d": b_fc1.reshape(1, 50),
        "b_fc2_2d": b_fc2.reshape(1, 10),
    }


# -----------------------------------------------------------------------------
# Pure-JAX reference (torch semantics) for the correctness check.
# -----------------------------------------------------------------------------
def _pool_ref(x):
    n, h, w, c = x.shape
    return x.reshape(n, h // 2, 2, w // 2, 2, c).max(axis=(2, 4))


def reference_forward(params, x_nchw):
    x = jnp.transpose(x_nchw, (0, 2, 3, 1))
    y = lax.conv_general_dilated(
        x, params["w_conv1"], (1, 1), "VALID",
        dimension_numbers=("NHWC", "HWIO", "NHWC"),
        precision=lax.Precision.HIGHEST) + params["b_conv1"]
    y = jnp.maximum(_pool_ref(y), 0.0)
    y = lax.conv_general_dilated(
        y, params["w_conv2"], (1, 1), "VALID",
        dimension_numbers=("NHWC", "HWIO", "NHWC"),
        precision=lax.Precision.HIGHEST) + params["b_conv2"]
    y = jnp.maximum(_pool_ref(y), 0.0)
    feat = jnp.transpose(y, (0, 3, 1, 2)).reshape(y.shape[0], -1)    # torch flatten
    h = jnp.maximum(
        jnp.dot(feat, params["w_fc1_t"], precision=lax.Precision.HIGHEST)
        + params["b_fc1"], 0.0)
    logits = jnp.dot(h, params["w_fc2"], precision=lax.Precision.HIGHEST) + params["b_fc2"]
    return jax.nn.log_softmax(logits, axis=-1)


if __name__ == "__main__":
    key = jax.random.PRNGKey(0)
    pkey, xkey = jax.random.split(key)
    params = init_params(pkey)

    # PyTorch NCHW input; 28x28 is what the 320-wide flatten implies.
    x = jax.random.normal(xkey, (2, 1, 28, 28), jnp.float32)

    forward = jax.jit(convnet_forward)
    out = jax.block_until_ready(forward(params, x))
    assert out.shape == (2, 10), out.shape

    ref = jax.block_until_ready(reference_forward(params, x))
    # Tolerance covers default-precision MXU f32 passes vs Precision.HIGHEST
    # reference; any indexing / weight-construction bug would be O(1) off.
    err = float(jnp.max(jnp.abs(out - ref)))
    assert err < 2e-2, err
    # log-softmax rows must exponentiate-sum to 1.
    psum = float(jnp.max(jnp.abs(jnp.sum(jnp.exp(out), axis=-1) - 1.0)))
    assert psum < 1e-3, psum

    print("KERNEL_OK")
</pallas_src>

<mosaic_0001>
module attributes {stable_mosaic.version = 11 : i64} {
  func.func @_convnet_kernel(%arg0: i32, %arg1: memref<1x1x28x28xf32, #tpu.memory_space<vmem>>, %arg2: memref<5x28x240xf32, #tpu.memory_space<vmem>>, %arg3: memref<1x240xf32, #tpu.memory_space<vmem>>, %arg4: memref<5x230x160xf32, #tpu.memory_space<vmem>>, %arg5: memref<1x160xf32, #tpu.memory_space<vmem>>, %arg6: memref<320x50xf32, #tpu.memory_space<vmem>>, %arg7: memref<1x50xf32, #tpu.memory_space<vmem>>, %arg8: memref<50x10xf32, #tpu.memory_space<vmem>>, %arg9: memref<1x10xf32, #tpu.memory_space<vmem>>, %arg10: memref<1x1x10xf32, #tpu.memory_space<vmem>>, %arg11: memref<1x320xf32, #tpu.memory_space<vmem>>) attributes {dimension_semantics = [#tpu.dimension_semantics<parallel>], iteration_bounds = array<i64: 2>, scalar_prefetch = 0 : i64, scratch_operands = 1 : i64, tpu.core_type = #tpu.core_type<tc>, window_params = [{transform_indices = @transform_0, window_bounds = array<i64: 1, 1, 28, 28>}, {pipeline_mode = #tpu.pipeline_mode<synchronous>, transform_indices = @transform_1, window_bounds = array<i64: 5, 28, 240>}, {pipeline_mode = #tpu.pipeline_mode<synchronous>, transform_indices = @transform_2, window_bounds = array<i64: 1, 240>}, {pipeline_mode = #tpu.pipeline_mode<synchronous>, transform_indices = @transform_3, window_bounds = array<i64: 5, 230, 160>}, {pipeline_mode = #tpu.pipeline_mode<synchronous>, transform_indices = @transform_4, window_bounds = array<i64: 1, 160>}, {pipeline_mode = #tpu.pipeline_mode<synchronous>, transform_indices = @transform_5, window_bounds = array<i64: 320, 50>}, {pipeline_mode = #tpu.pipeline_mode<synchronous>, transform_indices = @transform_6, window_bounds = array<i64: 1, 50>}, {pipeline_mode = #tpu.pipeline_mode<synchronous>, transform_indices = @transform_7, window_bounds = array<i64: 50, 10>}, {pipeline_mode = #tpu.pipeline_mode<synchronous>, transform_indices = @transform_8, window_bounds = array<i64: 1, 10>}, {transform_indices = @transform_9, window_bounds = array<i64: 1, 1, 10>}]} {
    %c0 = arith.constant 0 : index
    %c0_0 = arith.constant 0 : index
    %c0_1 = arith.constant 0 : index
    %c0_2 = arith.constant 0 : index
    %0 = vector.load %arg1[%c0, %c0_0, %c0_1, %c0_2] : memref<1x1x28x28xf32, #tpu.memory_space<vmem>>, vector<1x1x24x28xf32>
    %1 = vector.shape_cast %0 : vector<1x1x24x28xf32> to vector<24x28xf32>
    %c0_3 = arith.constant 0 : index
    %c0_4 = arith.constant 0 : index
    %c0_5 = arith.constant 0 : index
    %2 = vector.load %arg2[%c0_3, %c0_4, %c0_5] : memref<5x28x240xf32, #tpu.memory_space<vmem>>, vector<1x28x240xf32>
    %3 = vector.shape_cast %2 : vector<1x28x240xf32> to vector<28x240xf32>
    %cst = arith.constant dense<0.000000e+00> : vector<24x240xf32>
    %4 = tpu.matmul %1, %3, %cst {dimension_numbers = #tpu.dot_dimension_numbers<[1], [0], [0], [1], [0, 0, 1, 1], [], []>} : vector<24x28xf32>, vector<28x240xf32>, vector<24x240xf32> -> vector<24x240xf32>
    %c0_6 = arith.constant 0 : index
    %c0_7 = arith.constant 0 : index
    %c1 = arith.constant 1 : index
    %c0_8 = arith.constant 0 : index
    %5 = vector.load %arg1[%c0_6, %c0_7, %c1, %c0_8] : memref<1x1x28x28xf32, #tpu.memory_space<vmem>>, vector<1x1x24x28xf32>
    %6 = vector.shape_cast %5 : vector<1x1x24x28xf32> to vector<24x28xf32>
    %c1_9 = arith.constant 1 : index
    %c0_10 = arith.constant 0 : index
    %c0_11 = arith.constant 0 : index
    %7 = vector.load %arg2[%c1_9, %c0_10, %c0_11] : memref<5x28x240xf32, #tpu.memory_space<vmem>>, vector<1x28x240xf32>
    %8 = vector.shape_cast %7 : vector<1x28x240xf32> to vector<28x240xf32>
    %cst_12 = arith.constant dense<0.000000e+00> : vector<24x240xf32>
    %9 = tpu.matmul %6, %8, %cst_12 {dimension_numbers = #tpu.dot_dimension_numbers<[1], [0], [0], [1], [0, 0, 1, 1], [], []>} : vector<24x28xf32>, vector<28x240xf32>, vector<24x240xf32> -> vector<24x240xf32>
    %10 = arith.addf %4, %9 : vector<24x240xf32>
    %c0_13 = arith.constant 0 : index
    %c0_14 = arith.constant 0 : index
    %c2 = arith.constant 2 : index
    %c0_15 = arith.constant 0 : index
    %11 = vector.load %arg1[%c0_13, %c0_14, %c2, %c0_15] : memref<1x1x28x28xf32, #tpu.memory_space<vmem>>, vector<1x1x24x28xf32>
    %12 = vector.shape_cast %11 : vector<1x1x24x28xf32> to vector<24x28xf32>
    %c2_16 = arith.constant 2 : index
    %c0_17 = arith.constant 0 : index
    %c0_18 = arith.constant 0 : index
    %13 = vector.load %arg2[%c2_16, %c0_17, %c0_18] : memref<5x28x240xf32, #tpu.memory_space<vmem>>, vector<1x28x240xf32>
    %14 = vector.shape_cast %13 : vector<1x28x240xf32> to vector<28x240xf32>
    %cst_19 = arith.constant dense<0.000000e+00> : vector<24x240xf32>
    %15 = tpu.matmul %12, %14, %cst_19 {dimension_numbers = #tpu.dot_dimension_numbers<[1], [0], [0], [1], [0, 0, 1, 1], [], []>} : vector<24x28xf32>, vector<28x240xf32>, vector<24x240xf32> -> vector<24x240xf32>
    %16 = arith.addf %10, %15 : vector<24x240xf32>
    %c0_20 = arith.constant 0 : index
    %c0_21 = arith.constant 0 : index
    %c3 = arith.constant 3 : index
    %c0_22 = arith.constant 0 : index
    %17 = vector.load %arg1[%c0_20, %c0_21, %c3, %c0_22] : memref<1x1x28x28xf32, #tpu.memory_space<vmem>>, vector<1x1x24x28xf32>
    %18 = vector.shape_cast %17 : vector<1x1x24x28xf32> to vector<24x28xf32>
    %c3_23 = arith.constant 3 : index
    %c0_24 = arith.constant 0 : index
    %c0_25 = arith.constant 0 : index
    %19 = vector.load %arg2[%c3_23, %c0_24, %c0_25] : memref<5x28x240xf32, #tpu.memory_space<vmem>>, vector<1x28x240xf32>
    %20 = vector.shape_cast %19 : vector<1x28x240xf32> to vector<28x240xf32>
    %cst_26 = arith.constant dense<0.000000e+00> : vector<24x240xf32>
    %21 = tpu.matmul %18, %20, %cst_26 {dimension_numbers = #tpu.dot_dimension_numbers<[1], [0], [0], [1], [0, 0, 1, 1], [], []>} : vector<24x28xf32>, vector<28x240xf32>, vector<24x240xf32> -> vector<24x240xf32>
    %22 = arith.addf %16, %21 : vector<24x240xf32>
    %c0_27 = arith.constant 0 : index
    %c0_28 = arith.constant 0 : index
    %c4 = arith.constant 4 : index
    %c0_29 = arith.constant 0 : index
    %23 = vector.load %arg1[%c0_27, %c0_28, %c4, %c0_29] : memref<1x1x28x28xf32, #tpu.memory_space<vmem>>, vector<1x1x24x28xf32>
    %24 = vector.shape_cast %23 : vector<1x1x24x28xf32> to vector<24x28xf32>
    %c4_30 = arith.constant 4 : index
    %c0_31 = arith.constant 0 : index
    %c0_32 = arith.constant 0 : index
    %25 = vector.load %arg2[%c4_30, %c0_31, %c0_32] : memref<5x28x240xf32, #tpu.memory_space<vmem>>, vector<1x28x240xf32>
    %26 = vector.shape_cast %25 : vector<1x28x240xf32> to vector<28x240xf32>
    %cst_33 = arith.constant dense<0.000000e+00> : vector<24x240xf32>
    %27 = tpu.matmul %24, %26, %cst_33 {dimension_numbers = #tpu.dot_dimension_numbers<[1], [0], [0], [1], [0, 0, 1, 1], [], []>} : vector<24x28xf32>, vector<28x240xf32>, vector<24x240xf32> -> vector<24x240xf32>
    %28 = arith.addf %22, %27 : vector<24x240xf32>
    %c0_34 = arith.constant 0 : index
    %c0_35 = arith.constant 0 : index
    %29 = vector.load %arg3[%c0_34, %c0_35] : memref<1x240xf32, #tpu.memory_space<vmem>>, vector<1x240xf32>
    %30 = vector.broadcast %29 : vector<1x240xf32> to vector<24x240xf32>
    %31 = arith.addf %28, %30 : vector<24x240xf32>
    %cst_36 = arith.constant 0.000000e+00 : f32
    %32 = vector.broadcast %cst_36 : f32 to vector<24x240xf32>
    %33 = arith.maximumf %31, %32 : vector<24x240xf32>
    %34 = vector.extract_strided_slice %33 {offsets = [0, 0], sizes = [23, 240], strides = [1, 1]} : vector<24x240xf32> to vector<23x240xf32>
    %35 = vector.extract_strided_slice %33 {offsets = [1, 0], sizes = [23, 240], strides = [1, 1]} : vector<24x240xf32> to vector<23x240xf32>
    %36 = arith.maximumf %34, %35 : vector<23x240xf32>
    %37 = vector.extract_strided_slice %36 {offsets = [0, 0], sizes = [23, 230], strides = [1, 1]} : vector<23x240xf32> to vector<23x230xf32>
    %38 = vector.extract_strided_slice %36 {offsets = [0, 10], sizes = [23, 230], strides = [1, 1]} : vector<23x240xf32> to vector<23x230xf32>
    %39 = arith.maximumf %37, %38 : vector<23x230xf32>
    %40 = vector.extract_strided_slice %39 {offsets = [0, 0], sizes = [15, 230], strides = [1, 1]} : vector<23x230xf32> to vector<15x230xf32>
    %c0_37 = arith.constant 0 : index
    %c0_38 = arith.constant 0 : index
    %c0_39 = arith.constant 0 : index
    %41 = vector.load %arg4[%c0_37, %c0_38, %c0_39] : memref<5x230x160xf32, #tpu.memory_space<vmem>>, vector<1x230x160xf32>
    %42 = vector.shape_cast %41 : vector<1x230x160xf32> to vector<230x160xf32>
    %cst_40 = arith.constant dense<0.000000e+00> : vector<15x160xf32>
    %43 = tpu.matmul %40, %42, %cst_40 {dimension_numbers = #tpu.dot_dimension_numbers<[1], [0], [0], [1], [0, 0, 1, 1], [], []>} : vector<15x230xf32>, vector<230x160xf32>, vector<15x160xf32> -> vector<15x160xf32>
    %44 = vector.extract_strided_slice %39 {offsets = [2, 0], sizes = [15, 230], strides = [1, 1]} : vector<23x230xf32> to vector<15x230xf32>
    %c1_41 = arith.constant 1 : index
    %c0_42 = arith.constant 0 : index
    %c0_43 = arith.constant 0 : index
    %45 = vector.load %arg4[%c1_41, %c0_42, %c0_43] : memref<5x230x160xf32, #tpu.memory_space<vmem>>, vector<1x230x160xf32>
    %46 = vector.shape_cast %45 : vector<1x230x160xf32> to vector<230x160xf32>
    %cst_44 = arith.constant dense<0.000000e+00> : vector<15x160xf32>
    %47 = tpu.matmul %44, %46, %cst_44 {dimension_numbers = #tpu.dot_dimension_numbers<[1], [0], [0], [1], [0, 0, 1, 1], [], []>} : vector<15x230xf32>, vector<230x160xf32>, vector<15x160xf32> -> vector<15x160xf32>
    %48 = arith.addf %43, %47 : vector<15x160xf32>
    %49 = vector.extract_strided_slice %39 {offsets = [4, 0], sizes = [15, 230], strides = [1, 1]} : vector<23x230xf32> to vector<15x230xf32>
    %c2_45 = arith.constant 2 : index
    %c0_46 = arith.constant 0 : index
    %c0_47 = arith.constant 0 : index
    %50 = vector.load %arg4[%c2_45, %c0_46, %c0_47] : memref<5x230x160xf32, #tpu.memory_space<vmem>>, vector<1x230x160xf32>
    %51 = vector.shape_cast %50 : vector<1x230x160xf32> to vector<230x160xf32>
    %cst_48 = arith.constant dense<0.000000e+00> : vector<15x160xf32>
    %52 = tpu.matmul %49, %51, %cst_48 {dimension_numbers = #tpu.dot_dimension_numbers<[1], [0], [0], [1], [0, 0, 1, 1], [], []>} : vector<15x230xf32>, vector<230x160xf32>, vector<15x160xf32> -> vector<15x160xf32>
    %53 = arith.addf %48, %52 : vector<15x160xf32>
    %54 = vector.extract_strided_slice %39 {offsets = [6, 0], sizes = [15, 230], strides = [1, 1]} : vector<23x230xf32> to vector<15x230xf32>
    %c3_49 = arith.constant 3 : index
    %c0_50 = arith.constant 0 : index
    %c0_51 = arith.constant 0 : index
    %55 = vector.load %arg4[%c3_49, %c0_50, %c0_51] : memref<5x230x160xf32, #tpu.memory_space<vmem>>, vector<1x230x160xf32>
    %56 = vector.shape_cast %55 : vector<1x230x160xf32> to vector<230x160xf32>
    %cst_52 = arith.constant dense<0.000000e+00> : vector<15x160xf32>
    %57 = tpu.matmul %54, %56, %cst_52 {dimension_numbers = #tpu.dot_dimension_numbers<[1], [0], [0], [1], [0, 0, 1, 1], [], []>} : vector<15x230xf32>, vector<230x160xf32>, vector<15x160xf32> -> vector<15x160xf32>
    %58 = arith.addf %53, %57 : vector<15x160xf32>
    %59 = vector.extract_strided_slice %39 {offsets = [8, 0], sizes = [15, 230], strides = [1, 1]} : vector<23x230xf32> to vector<15x230xf32>
    %c4_53 = arith.constant 4 : index
    %c0_54 = arith.constant 0 : index
    %c0_55 = arith.constant 0 : index
    %60 = vector.load %arg4[%c4_53, %c0_54, %c0_55] : memref<5x230x160xf32, #tpu.memory_space<vmem>>, vector<1x230x160xf32>
    %61 = vector.shape_cast %60 : vector<1x230x160xf32> to vector<230x160xf32>
    %cst_56 = arith.constant dense<0.000000e+00> : vector<15x160xf32>
    %62 = tpu.matmul %59, %61, %cst_56 {dimension_numbers = #tpu.dot_dimension_numbers<[1], [0], [0], [1], [0, 0, 1, 1], [], []>} : vector<15x230xf32>, vector<230x160xf32>, vector<15x160xf32> -> vector<15x160xf32>
    %63 = arith.addf %58, %62 : vector<15x160xf32>
    %c0_57 = arith.constant 0 : index
    %c0_58 = arith.constant 0 : index
    %64 = vector.load %arg5[%c0_57, %c0_58] : memref<1x160xf32, #tpu.memory_space<vmem>>, vector<1x160xf32>
    %65 = vector.broadcast %64 : vector<1x160xf32> to vector<15x160xf32>
    %66 = arith.addf %63, %65 : vector<15x160xf32>
    %cst_59 = arith.constant 0.000000e+00 : f32
    %67 = vector.broadcast %cst_59 : f32 to vector<15x160xf32>
    %68 = arith.maximumf %66, %67 : vector<15x160xf32>
    %69 = vector.extract_strided_slice %68 {offsets = [0, 0], sizes = [13, 160], strides = [1, 1]} : vector<15x160xf32> to vector<13x160xf32>
    %70 = vector.extract_strided_slice %68 {offsets = [2, 0], sizes = [13, 160], strides = [1, 1]} : vector<15x160xf32> to vector<13x160xf32>
    %71 = arith.maximumf %69, %70 : vector<13x160xf32>
    %72 = vector.extract_strided_slice %71 {offsets = [0, 0], sizes = [13, 140], strides = [1, 1]} : vector<13x160xf32> to vector<13x140xf32>
    %73 = vector.extract_strided_slice %71 {offsets = [0, 20], sizes = [13, 140], strides = [1, 1]} : vector<13x160xf32> to vector<13x140xf32>
    %74 = arith.maximumf %72, %73 : vector<13x140xf32>
    %75 = vector.extract_strided_slice %74 {offsets = [0, 0], sizes = [1, 20], strides = [1, 1]} : vector<13x140xf32> to vector<1x20xf32>
    %c0_60 = arith.constant 0 : index
    %c0_61 = arith.constant 0 : index
    %76 = vector.load %arg11[%c0_60, %c0_61] : memref<1x320xf32, #tpu.memory_space<vmem>>, vector<1x20xf32>
    tpu.vector_store %arg11[%c0_60, %c0_61], %75 {strides = array<i32>} : memref<1x320xf32, #tpu.memory_space<vmem>>, vector<1x20xf32>,
    %77 = vector.extract_strided_slice %74 {offsets = [0, 40], sizes = [1, 20], strides = [1, 1]} : vector<13x140xf32> to vector<1x20xf32>
    %c0_62 = arith.constant 0 : index
    %c20 = arith.constant 20 : index
    %78 = vector.load %arg11[%c0_62, %c20] : memref<1x320xf32, #tpu.memory_space<vmem>>, vector<1x20xf32>
    tpu.vector_store %arg11[%c0_62, %c20], %77 {strides = array<i32>} : memref<1x320xf32, #tpu.memory_space<vmem>>, vector<1x20xf32>,
    %79 = vector.extract_strided_slice %74 {offsets = [0, 80], sizes = [1, 20], strides = [1, 1]} : vector<13x140xf32> to vector<1x20xf32>
    %c0_63 = arith.constant 0 : index
    %c40 = arith.constant 40 : index
    %80 = vector.load %arg11[%c0_63, %c40] : memref<1x320xf32, #tpu.memory_space<vmem>>, vector<1x20xf32>
    tpu.vector_store %arg11[%c0_63, %c40], %79 {strides = array<i32>} : memref<1x320xf32, #tpu.memory_space<vmem>>, vector<1x20xf32>,
    %81 = vector.extract_strided_slice %74 {offsets = [0, 120], sizes = [1, 20], strides = [1, 1]} : vector<13x140xf32> to vector<1x20xf32>
    %c0_64 = arith.constant 0 : index
    %c60 = arith.constant 60 : index
    %82 = vector.load %arg11[%c0_64, %c60] : memref<1x320xf32, #tpu.memory_space<vmem>>, vector<1x20xf32>
    tpu.vector_store %arg11[%c0_64, %c60], %81 {strides = array<i32>} : memref<1x320xf32, #tpu.memory_space<vmem>>, vector<1x20xf32>,
    %83 = vector.extract_strided_slice %74 {offsets = [4, 0], sizes = [1, 20], strides = [1, 1]} : vector<13x140xf32> to vector<1x20xf32>
    %c0_65 = arith.constant 0 : index
    %c80 = arith.constant 80 : index
    %84 = vector.load %arg11[%c0_65, %c80] : memref<1x320xf32, #tpu.memory_space<vmem>>, vector<1x20xf32>
    tpu.vector_store %arg11[%c0_65, %c80], %83 {strides = array<i32>} : memref<1x320xf32, #tpu.memory_space<vmem>>, vector<1x20xf32>,
    %85 = vector.extract_strided_slice %74 {offsets = [4, 40], sizes = [1, 20], strides = [1, 1]} : vector<13x140xf32> to vector<1x20xf32>
    %c0_66 = arith.constant 0 : index
    %c100 = arith.constant 100 : index
    %86 = vector.load %arg11[%c0_66, %c100] : memref<1x320xf32, #tpu.memory_space<vmem>>, vector<1x20xf32>
    tpu.vector_store %arg11[%c0_66, %c100], %85 {strides = array<i32>} : memref<1x320xf32, #tpu.memory_space<vmem>>, vector<1x20xf32>,
    %87 = vector.extract_strided_slice %74 {offsets = [4, 80], sizes = [1, 20], strides = [1, 1]} : vector<13x140xf32> to vector<1x20xf32>
    %c0_67 = arith.constant 0 : index
    %c120 = arith.constant 120 : index
    %88 = vector.load %arg11[%c0_67, %c120] : memref<1x320xf32, #tpu.memory_space<vmem>>, vector<1x20xf32>
    tpu.vector_store %arg11[%c0_67, %c120], %87 {strides = array<i32>} : memref<1x320xf32, #tpu.memory_space<vmem>>, vector<1x20xf32>,
    %89 = vector.extract_strided_slice %74 {offsets = [4, 120], sizes = [1, 20], strides = [1, 1]} : vector<13x140xf32> to vector<1x20xf32>
    %c0_68 = arith.constant 0 : index
    %c140 = arith.constant 140 : index
    %90 = vector.load %arg11[%c0_68, %c140] : memref<1x320xf32, #tpu.memory_space<vmem>>, vector<1x20xf32>
    tpu.vector_store %arg11[%c0_68, %c140], %89 {strides = array<i32>} : memref<1x320xf32, #tpu.memory_space<vmem>>, vector<1x20xf32>,
    %91 = vector.extract_strided_slice %74 {offsets = [8, 0], sizes = [1, 20], strides = [1, 1]} : vector<13x140xf32> to vector<1x20xf32>
    %c0_69 = arith.constant 0 : index
    %c160 = arith.constant 160 : index
    %92 = vector.load %arg11[%c0_69, %c160] : memref<1x320xf32, #tpu.memory_space<vmem>>, vector<1x20xf32>
    tpu.vector_store %arg11[%c0_69, %c160], %91 {strides = array<i32>} : memref<1x320xf32, #tpu.memory_space<vmem>>, vector<1x20xf32>,
    %93 = vector.extract_strided_slice %74 {offsets = [8, 40], sizes = [1, 20], strides = [1, 1]} : vector<13x140xf32> to vector<1x20xf32>
    %c0_70 = arith.constant 0 : index
    %c180 = arith.constant 180 : index
    %94 = vector.load %arg11[%c0_70, %c180] : memref<1x320xf32, #tpu.memory_space<vmem>>, vector<1x20xf32>
    tpu.vector_store %arg11[%c0_70, %c180], %93 {strides = array<i32>} : memref<1x320xf32, #tpu.memory_space<vmem>>, vector<1x20xf32>,
    %95 = vector.extract_strided_slice %74 {offsets = [8, 80], sizes = [1, 20], strides = [1, 1]} : vector<13x140xf32> to vector<1x20xf32>
    %c0_71 = arith.constant 0 : index
    %c200 = arith.constant 200 : index
    %96 = vector.load %arg11[%c0_71, %c200] : memref<1x320xf32, #tpu.memory_space<vmem>>, vector<1x20xf32>
    tpu.vector_store %arg11[%c0_71, %c200], %95 {strides = array<i32>} : memref<1x320xf32, #tpu.memory_space<vmem>>, vector<1x20xf32>,
    %97 = vector.extract_strided_slice %74 {offsets = [8, 120], sizes = [1, 20], strides = [1, 1]} : vector<13x140xf32> to vector<1x20xf32>
    %c0_72 = arith.constant 0 : index
    %c220 = arith.constant 220 : index
    %98 = vector.load %arg11[%c0_72, %c220] : memref<1x320xf32, #tpu.memory_space<vmem>>, vector<1x20xf32>
    tpu.vector_store %arg11[%c0_72, %c220], %97 {strides = array<i32>} : memref<1x320xf32, #tpu.memory_space<vmem>>, vector<1x20xf32>,
    %99 = vector.extract_strided_slice %74 {offsets = [12, 0], sizes = [1, 20], strides = [1, 1]} : vector<13x140xf32> to vector<1x20xf32>
    %c0_73 = arith.constant 0 : index
    %c240 = arith.constant 240 : index
    %100 = vector.load %arg11[%c0_73, %c240] : memref<1x320xf32, #tpu.memory_space<vmem>>, vector<1x20xf32>
    tpu.vector_store %arg11[%c0_73, %c240], %99 {strides = array<i32>} : memref<1x320xf32, #tpu.memory_space<vmem>>, vector<1x20xf32>,
    %101 = vector.extract_strided_slice %74 {offsets = [12, 40], sizes = [1, 20], strides = [1, 1]} : vector<13x140xf32> to vector<1x20xf32>
    %c0_74 = arith.constant 0 : index
    %c260 = arith.constant 260 : index
    %102 = vector.load %arg11[%c0_74, %c260] : memref<1x320xf32, #tpu.memory_space<vmem>>, vector<1x20xf32>
    tpu.vector_store %arg11[%c0_74, %c260], %101 {strides = array<i32>} : memref<1x320xf32, #tpu.memory_space<vmem>>, vector<1x20xf32>,
    %103 = vector.extract_strided_slice %74 {offsets = [12, 80], sizes = [1, 20], strides = [1, 1]} : vector<13x140xf32> to vector<1x20xf32>
    %c0_75 = arith.constant 0 : index
    %c280 = arith.constant 280 : index
    %104 = vector.load %arg11[%c0_75, %c280] : memref<1x320xf32, #tpu.memory_space<vmem>>, vector<1x20xf32>
    tpu.vector_store %arg11[%c0_75, %c280], %103 {strides = array<i32>} : memref<1x320xf32, #tpu.memory_space<vmem>>, vector<1x20xf32>,
    %105 = vector.extract_strided_slice %74 {offsets = [12, 120], sizes = [1, 20], strides = [1, 1]} : vector<13x140xf32> to vector<1x20xf32>
    %c0_76 = arith.constant 0 : index
    %c300 = arith.constant 300 : index
    %106 = vector.load %arg11[%c0_76, %c300] : memref<1x320xf32, #tpu.memory_space<vmem>>, vector<1x20xf32>
    tpu.vector_store %arg11[%c0_76, %c300], %105 {strides = array<i32>} : memref<1x320xf32, #tpu.memory_space<vmem>>, vector<1x20xf32>,
    %c0_77 = arith.constant 0 : index
    %c0_78 = arith.constant 0 : index
    %107 = vector.load %arg11[%c0_77, %c0_78] : memref<1x320xf32, #tpu.memory_space<vmem>>, vector<1x320xf32>
    %c0_79 = arith.constant 0 : index
    %c0_80 = arith.constant 0 : index
    %108 = vector.load %arg6[%c0_79, %c0_80] : memref<320x50xf32, #tpu.memory_space<vmem>>, vector<320x50xf32>
    %cst_81 = arith.constant dense<0.000000e+00> : vector<1x50xf32>
    %109 = tpu.matmul %107, %108, %cst_81 {dimension_numbers = #tpu.dot_dimension_numbers<[1], [0], [0], [1], [0, 0, 1, 1], [], []>} : vector<1x320xf32>, vector<320x50xf32>, vector<1x50xf32> -> vector<1x50xf32>
    %c0_82 = arith.constant 0 : index
    %c0_83 = arith.constant 0 : index
    %110 = vector.load %arg7[%c0_82, %c0_83] : memref<1x50xf32, #tpu.memory_space<vmem>>, vector<1x50xf32>
    %111 = arith.addf %109, %110 : vector<1x50xf32>
    %cst_84 = arith.constant 0.000000e+00 : f32
    %112 = vector.broadcast %cst_84 : f32 to vector<1x50xf32>
    %113 = arith.maximumf %111, %112 : vector<1x50xf32>
    %c0_85 = arith.constant 0 : index
    %c0_86 = arith.constant 0 : index
    %114 = vector.load %arg8[%c0_85, %c0_86] : memref<50x10xf32, #tpu.memory_space<vmem>>, vector<50x10xf32>
    %cst_87 = arith.constant dense<0.000000e+00> : vector<1x10xf32>
    %115 = tpu.matmul %113, %114, %cst_87 {dimension_numbers = #tpu.dot_dimension_numbers<[1], [0], [0], [1], [0, 0, 1, 1], [], []>} : vector<1x50xf32>, vector<50x10xf32>, vector<1x10xf32> -> vector<1x10xf32>
    %c0_88 = arith.constant 0 : index
    %c0_89 = arith.constant 0 : index
    %116 = vector.load %arg9[%c0_88, %c0_89] : memref<1x10xf32, #tpu.memory_space<vmem>>, vector<1x10xf32>
    %117 = arith.addf %115, %116 : vector<1x10xf32>
    %cst_90 = arith.constant dense<0xFF800000> : vector<1xf32>
    %118 = vector.multi_reduction <maximumf>, %117, %cst_90 [1] : vector<1x10xf32> to vector<1xf32>
    %119 = vector.shape_cast %118 : vector<1xf32> to vector<1x1xf32>
    %120 = vector.broadcast %119 : vector<1x1xf32> to vector<1x10xf32>
    %121 = arith.subf %117, %120 : vector<1x10xf32>
    %122 = math.exp %121 : vector<1x10xf32>
    %cst_91 = arith.constant dense<0.000000e+00> : vector<1xf32>
    %123 = vector.multi_reduction <add>, %122, %cst_91 [1] : vector<1x10xf32> to vector<1xf32>
    %124 = vector.shape_cast %123 : vector<1xf32> to vector<1x1xf32>
    %125 = math.log %124 : vector<1x1xf32>
    %126 = arith.addf %125, %119 : vector<1x1xf32>
    %127 = vector.broadcast %126 : vector<1x1xf32> to vector<1x10xf32>
    %128 = arith.subf %117, %127 : vector<1x10xf32>
    %c0_92 = arith.constant 0 : index
    %c0_93 = arith.constant 0 : index
    %c0_94 = arith.constant 0 : index
    %129 = vector.load %arg10[%c0_92, %c0_93, %c0_94] : memref<1x1x10xf32, #tpu.memory_space<vmem>>, vector<1x1x10xf32>
    %130 = vector.shape_cast %129 : vector<1x1x10xf32> to vector<1x10xf32>
    %131 = vector.shape_cast %128 : vector<1x10xf32> to vector<1x1x10xf32>
    tpu.vector_store %arg10[%c0_92, %c0_93, %c0_94], %131 {strides = array<i32>} : memref<1x1x10xf32, #tpu.memory_space<vmem>>, vector<1x1x10xf32>,
    return
  }
  func.func @transform_0(%arg0: i32) -> (i32, i32, i32, i32) {
    %c0_i32 = arith.constant 0 : i32
    %c0_i32_0 = arith.constant 0 : i32
    %c0_i32_1 = arith.constant 0 : i32
    %c0_i32_2 = arith.constant 0 : i32
    return %arg0, %c0_i32, %c0_i32_0, %c0_i32_1 : i32, i32, i32, i32
  }
  func.func @transform_1(%arg0: i32) -> (i32, i32, i32) {
    %c0_i32 = arith.constant 0 : i32
    %c0_i32_0 = arith.constant 0 : i32
    %c0_i32_1 = arith.constant 0 : i32
    %c0_i32_2 = arith.constant 0 : i32
    return %c0_i32, %c0_i32_0, %c0_i32_1 : i32, i32, i32
  }
  func.func @transform_2(%arg0: i32) -> (i32, i32) {
    %c0_i32 = arith.constant 0 : i32
    %c0_i32_0 = arith.constant 0 : i32
    %c0_i32_1 = arith.constant 0 : i32
    return %c0_i32, %c0_i32_0 : i32, i32
  }
  func.func @transform_3(%arg0: i32) -> (i32, i32, i32) {
    %c0_i32 = arith.constant 0 : i32
    %c0_i32_0 = arith.constant 0 : i32
    %c0_i32_1 = arith.constant 0 : i32
    %c0_i32_2 = arith.constant 0 : i32
    return %c0_i32, %c0_i32_0, %c0_i32_1 : i32, i32, i32
  }
  func.func @transform_4(%arg0: i32) -> (i32, i32) {
    %c0_i32 = arith.constant 0 : i32
    %c0_i32_0 = arith.constant 0 : i32
    %c0_i32_1 = arith.constant 0 : i32
    return %c0_i32, %c0_i32_0 : i32, i32
  }
  func.func @transform_5(%arg0: i32) -> (i32, i32) {
    %c0_i32 = arith.constant 0 : i32
    %c0_i32_0 = arith.constant 0 : i32
    %c0_i32_1 = arith.constant 0 : i32
    return %c0_i32, %c0_i32_0 : i32, i32
  }
  func.func @transform_6(%arg0: i32) -> (i32, i32) {
    %c0_i32 = arith.constant 0 : i32
    %c0_i32_0 = arith.constant 0 : i32
    %c0_i32_1 = arith.constant 0 : i32
    return %c0_i32, %c0_i32_0 : i32, i32
  }
  func.func @transform_7(%arg0: i32) -> (i32, i32) {
    %c0_i32 = arith.constant 0 : i32
    %c0_i32_0 = arith.constant 0 : i32
    %c0_i32_1 = arith.constant 0 : i32
    return %c0_i32, %c0_i32_0 : i32, i32
  }
  func.func @transform_8(%arg0: i32) -> (i32, i32) {
    %c0_i32 = arith.constant 0 : i32
    %c0_i32_0 = arith.constant 0 : i32
    %c0_i32_1 = arith.constant 0 : i32
    return %c0_i32, %c0_i32_0 : i32, i32
  }
  func.func @transform_9(%arg0: i32) -> (i32, i32, i32) {
    %c0_i32 = arith.constant 0 : i32
    %c0_i32_0 = arith.constant 0 : i32
    %c0_i32_1 = arith.constant 0 : i32
    return %arg0, %c0_i32, %c0_i32_0 : i32, i32, i32
  }
}

</mosaic_0001>

<llo_original>
// kernel: convnet_forward.1
$region0: #{convnet_forward.1}
  #allocation0 [shape = 'u32[]', space=smem, size = 0x4, offset = 0x4, fixed_abs, tag = 'smem constant byte address 0x4 - core index']
  #allocation1 [shape = 'u32[72,128]{1,0:T(1,128)}', space=vmem, size = 0x9000, scoped, tag = 'internal scratch']
  #allocation2 [shape = 'f32[1,320]{1,0:T(1,128)}', space=vmem, size = 0x600, scoped, tag = 'scratch operand']
  %s0 = inlined_call_operand.vmem [shape: f32[2,1,28,28], index: 0, kind: input, shape index: {}]
  %s1 = inlined_call_operand.vmem [shape: f32[5,28,240], index: 1, kind: input, shape index: {}]
  %s2 = inlined_call_operand.vmem [shape: f32[1,240], index: 2, kind: input, shape index: {}]
  %s3 = inlined_call_operand.vmem [shape: f32[5,230,160], index: 3, kind: input, shape index: {}]
  %s4 = inlined_call_operand.vmem [shape: f32[1,160], index: 4, kind: input, shape index: {}]
  %s5 = inlined_call_operand.vmem [shape: f32[320,50], index: 5, kind: input, shape index: {}]
  %s6 = inlined_call_operand.vmem [shape: f32[1,50], index: 6, kind: input, shape index: {}]
  %s7 = inlined_call_operand.vmem [shape: f32[50,10], index: 7, kind: input, shape index: {}]
  %s8 = inlined_call_operand.vmem [shape: f32[1,10], index: 8, kind: input, shape index: {}]
  %s9 = inlined_call_operand.hbm [shape: f32[2,1,10], index: 9, kind: output, shape index: {}]
  %s10 = sld [smem:[#allocation0]]
  $region69: #{convnet_forward.1} parent=0
    _
  %s12 = ssub.s32 1, %s10
  %s13 = scalar_select 0, %s12, %s10
  $region1: #{convnet_forward.1} parent=0
    #allocation3 [shape = 'u8[1024]{0}', space=vmem, size = 0x400, scoped, tag = 'output window, operand 0']
    #allocation4 [shape = 's32[2]{0}', space=sflag, size = 0x8, scoped, tag = 'scoped memory for convnet_forward.1']
    %14 = vsyncpa [#allocation4], 0
    %s15 = scalar_lea.sflag [#allocation4], 1
    %16 = vsyncpa %s15, 0
    loop: start=0, step=1, limit=4
    $region2: #{convnet_forward.1} parent=1 // loop_pre_header
      _
    $region3: #{convnet_forward.1} parent=1 // loop_header
      %s18 = sphi 0, %s22
      %p19 = scmp.ge.s32.totalorder %s18, 4
      %s28 = sphi 0, %s30
      %s31 = sphi 0, %s28
      %s32 = sphi 0, %s31
      %s48 = sphi 0, %s32
      %s52 = sphi 0, %s52
      %s54 = sphi 0, %s52
      %s55 = sphi 0, %s54
      %s69 = sphi 0, %s55
      %s73 = sphi 0, %s73
      %s75 = sphi 0, %s73
      %s76 = sphi 0, %s75
      %s90 = sphi 0, %s76
      %s94 = sphi 0, %s94
      %s96 = sphi 0, %s94
      %s97 = sphi 0, %s96
      %s111 = sphi 0, %s97
      %s115 = sphi 0, %s115
      %s117 = sphi 0, %s115
      %s118 = sphi 0, %s117
      %s132 = sphi 0, %s118
      %s136 = sphi 0, %s136
      %s138 = sphi 0, %s136
      %s139 = sphi 0, %s138
      %s153 = sphi 0, %s139
      %s157 = sphi 0, %s157
      %s159 = sphi 0, %s157
      %s160 = sphi 0, %s159
      %s174 = sphi 0, %s160
      %s178 = sphi 0, %s178
      %s180 = sphi 0, %s178
      %s181 = sphi 0, %s180
      %s195 = sphi 0, %s181
      %s199 = sphi 0, %s199
      %s201 = sphi 0, %s199
      %s202 = sphi 0, %s201
      %s216 = sphi 0, %s202
      %s222 = sphi 0, %s224
      %s225 = sphi 0, %s222
      %s226 = sphi 0, %s225
      %s242 = sphi 0, %s226
    $region4: #{convnet_forward.1} parent=1 // loop_header_branch
      %21 = sbr.rel (%p19) target = $region8
    $region5: #{convnet_forward.1} parent=1 // loop_body
      %s23 = ssub.s32 %s18, 1
      %s24 = ssub.s32 %s18, 2
      %s25 = sadd.s32 %s18, 1
      %s26 = ssub.s32 %s18, %s25
      %p27 = scmp.eq.s32.totalorder %s26, 0
      %s29 = sadd.s32 %s28, 1
      %s30 = scalar_select %p27, %s28, %s29
      %p33 = pneg %p27
      %p34 = scmp.eq.s32.totalorder %s18, 1
      %p35 = por %p33, %p34
      %p36 = scmp.ne.s32.totalorder %s28, %s31
      %p37 = scmp.eq.s32.totalorder %s18, 0
      %p38 = por %p36, %p37
      %p39 = scmp.ne.s32.totalorder %s28, %s31
      %p40 = scmp.eq.s32.totalorder %s23, 1
      %p41 = por %p39, %p40
      %p42 = scmp.ne.s32.totalorder %s31, %s32
      %p43 = scmp.eq.s32.totalorder %s23, 0
      %p44 = por %p42, %p43
      %p45 = scmp.ne.s32.totalorder %s31, %s32
      %p46 = scmp.eq.s32.totalorder %s24, 1
      %p47 = por %p45, %p46
      %p49 = scmp.ne.s32.totalorder %s32, %s48
      %p50 = scmp.eq.s32.totalorder %s24, 0
      %p51 = por %p49, %p50
      %s53 = sadd.s32 %s52, 1
      %p56 = scmp.eq.s32.totalorder %s18, 1
      %p57 = scmp.ne.s32.totalorder %s52, %s54
      %p58 = scmp.eq.s32.totalorder %s18, 0
      %p59 = por %p57, %p58
      %p60 = scmp.ne.s32.totalorder %s52, %s54
      %p61 = scmp.eq.s32.totalorder %s23, 1
      %p62 = por %p60, %p61
      %p63 = scmp.ne.s32.totalorder %s54, %s55
      %p64 = scmp.eq.s32.totalorder %s23, 0
      %p65 = por %p63, %p64
      %p66 = scmp.ne.s32.totalorder %s54, %s55
      %p67 = scmp.eq.s32.totalorder %s24, 1
      %p68 = por %p66, %p67
      %p70 = scmp.ne.s32.totalorder %s55, %s69
      %p71 = scmp.eq.s32.totalorder %s24, 0
      %p72 = por %p70, %p71
      %s74 = sadd.s32 %s73, 1
      %p77 = scmp.eq.s32.totalorder %s18, 1
      %p78 = scmp.ne.s32.totalorder %s73, %s75
      %p79 = scmp.eq.s32.totalorder %s18, 0
      %p80 = por %p78, %p79
      %p81 = scmp.ne.s32.totalorder %s73, %s75
      %p82 = scmp.eq.s32.totalorder %s23, 1
      %p83 = por %p81, %p82
      %p84 = scmp.ne.s32.totalorder %s75, %s76
      %p85 = scmp.eq.s32.totalorder %s23, 0
      %p86 = por %p84, %p85
      %p87 = scmp.ne.s32.totalorder %s75, %s76
      %p88 = scmp.eq.s32.totalorder %s24, 1
      %p89 = por %p87, %p88
      %p91 = scmp.ne.s32.totalorder %s76, %s90
      %p92 = scmp.eq.s32.totalorder %s24, 0
      %p93 = por %p91, %p92
      %s95 = sadd.s32 %s94, 1
      %p98 = scmp.eq.s32.totalorder %s18, 1
      %p99 = scmp.ne.s32.totalorder %s94, %s96
      %p100 = scmp.eq.s32.totalorder %s18, 0
      %p101 = por %p99, %p100
      %p102 = scmp.ne.s32.totalorder %s94, %s96
      %p103 = scmp.eq.s32.totalorder %s23, 1
      %p104 = por %p102, %p103
      %p105 = scmp.ne.s32.totalorder %s96, %s97
      %p106 = scmp.eq.s32.totalorder %s23, 0
      %p107 = por %p105, %p106
      %p108 = scmp.ne.s32.totalorder %s96, %s97
      %p109 = scmp.eq.s32.totalorder %s24, 1
      %p110 = por %p108, %p109
      %p112 = scmp.ne.s32.totalorder %s97, %s111
      %p113 = scmp.eq.s32.totalorder %s24, 0
      %p114 = por %p112, %p113
      %s116 = sadd.s32 %s115, 1
      %p119 = scmp.eq.s32.totalorder %s18, 1
      %p120 = scmp.ne.s32.totalorder %s115, %s117
      %p121 = scmp.eq.s32.totalorder %s18, 0
      %p122 = por %p120, %p121
      %p123 = scmp.ne.s32.totalorder %s115, %s117
      %p124 = scmp.eq.s32.totalorder %s23, 1
      %p125 = por %p123, %p124
      %p126 = scmp.ne.s32.totalorder %s117, %s118
      %p127 = scmp.eq.s32.totalorder %s23, 0
      %p128 = por %p126, %p127
      %p129 = scmp.ne.s32.totalorder %s117, %s118
      %p130 = scmp.eq.s32.totalorder %s24, 1
      %p131 = por %p129, %p130
      %p133 = scmp.ne.s32.totalorder %s118, %s132
      %p134 = scmp.eq.s32.totalorder %s24, 0
      %p135 = por %p133, %p134
      %s137 = sadd.s32 %s136, 1
      %p140 = scmp.eq.s32.totalorder %s18, 1
      %p141 = scmp.ne.s32.totalorder %s136, %s138
      %p142 = scmp.eq.s32.totalorder %s18, 0
      %p143 = por %p141, %p142
      %p144 = scmp.ne.s32.totalorder %s136, %s138
      %p145 = scmp.eq.s32.totalorder %s23, 1
      %p146 = por %p144, %p145
      %p147 = scmp.ne.s32.totalorder %s138, %s139
      %p148 = scmp.eq.s32.totalorder %s23, 0
      %p149 = por %p147, %p148
      %p150 = scmp.ne.s32.totalorder %s138, %s139
      %p151 = scmp.eq.s32.totalorder %s24, 1
      %p152 = por %p150, %p151
      %p154 = scmp.ne.s32.totalorder %s139, %s153
      %p155 = scmp.eq.s32.totalorder %s24, 0
      %p156 = por %p154, %p155
      %s158 = sadd.s32 %s157, 1
      %p161 = scmp.eq.s32.totalorder %s18, 1
      %p162 = scmp.ne.s32.totalorder %s157, %s159
      %p163 = scmp.eq.s32.totalorder %s18, 0
      %p164 = por %p162, %p163
      %p165 = scmp.ne.s32.totalorder %s157, %s159
      %p166 = scmp.eq.s32.totalorder %s23, 1
      %p167 = por %p165, %p166
      %p168 = scmp.ne.s32.totalorder %s159, %s160
      %p169 = scmp.eq.s32.totalorder %s23, 0
      %p170 = por %p168, %p169
      %p171 = scmp.ne.s32.totalorder %s159, %s160
      %p172 = scmp.eq.s32.totalorder %s24, 1
      %p173 = por %p171, %p172
      %p175 = scmp.ne.s32.totalorder %s160, %s174
      %p176 = scmp.eq.s32.totalorder %s24, 0
      %p177 = por %p175, %p176
      %s179 = sadd.s32 %s178, 1
      %p182 = scmp.eq.s32.totalorder %s18, 1
      %p183 = scmp.ne.s32.totalorder %s178, %s180
      %p184 = scmp.eq.s32.totalorder %s18, 0
      %p185 = por %p183, %p184
      %p186 = scmp.ne.s32.totalorder %s178, %s180
      %p187 = scmp.eq.s32.totalorder %s23, 1
      %p188 = por %p186, %p187
      %p189 = scmp.ne.s32.totalorder %s180, %s181
      %p190 = scmp.eq.s32.totalorder %s23, 0
      %p191 = por %p189, %p190
      %p192 = scmp.ne.s32.totalorder %s180, %s181
      %p193 = scmp.eq.s32.totalorder %s24, 1
      %p194 = por %p192, %p193
      %p196 = scmp.ne.s32.totalorder %s181, %s195
      %p197 = scmp.eq.s32.totalorder %s24, 0
      %p198 = por %p196, %p197
      %s200 = sadd.s32 %s199, 1
      %p203 = scmp.eq.s32.totalorder %s18, 1
      %p204 = scmp.ne.s32.totalorder %s199, %s201
      %p205 = scmp.eq.s32.totalorder %s18, 0
      %p206 = por %p204, %p205
      %p207 = scmp.ne.s32.totalorder %s199, %s201
      %p208 = scmp.eq.s32.totalorder %s23, 1
      %p209 = por %p207, %p208
      %p210 = scmp.ne.s32.totalorder %s201, %s202
      %p211 = scmp.eq.s32.totalorder %s23, 0
      %p212 = por %p210, %p211
      %p213 = scmp.ne.s32.totalorder %s201, %s202
      %p214 = scmp.eq.s32.totalorder %s24, 1
      %p215 = por %p213, %p214
      %p217 = scmp.ne.s32.totalorder %s202, %s216
      %p218 = scmp.eq.s32.totalorder %s24, 0
      %p219 = por %p217, %p218
      %s220 = ssub.s32 %s18, %s25
      %p221 = scmp.eq.s32.totalorder %s220, 0
      %s223 = sadd.s32 %s222, 1
      %s224 = scalar_select %p221, %s222, %s223
      %p227 = pneg %p221
      %p228 = scmp.eq.s32.totalorder %s18, 1
      %p229 = por %p227, %p228
      %p230 = scmp.ne.s32.totalorder %s222, %s225
      %p231 = scmp.eq.s32.totalorder %s18, 0
      %p232 = por %p230, %p231
      %p233 = scmp.ne.s32.totalorder %s222, %s225
      %p234 = scmp.eq.s32.totalorder %s23, 1
      %p235 = por %p233, %p234
      %p236 = scmp.ne.s32.totalorder %s225, %s226
      %p237 = scmp.eq.s32.totalorder %s23, 0
      %p238 = por %p236, %p237
      %p239 = scmp.ne.s32.totalorder %s225, %s226
      %p240 = scmp.eq.s32.totalorder %s24, 1
      %p241 = por %p239, %p240
      %p243 = scmp.ne.s32.totalorder %s226, %s242
      %p244 = scmp.eq.s32.totalorder %s24, 0
      %p245 = por %p243, %p244
      %p246 = scmp.le.s32.totalorder 1, %s18
      %p247 = scmp.lt.s32.totalorder %s18, 3
      %p248 = pnand %p246, %p247
      %p249 = pneg %p248
      // Predicated region
      $region9: #{convnet_forward.1} parent=5 // pred_check
        _
      $region10: #{convnet_forward.1} parent=5 // pred_check_branch
        %251 = sbr.rel (%p248) target = $region12
      $region11: #{convnet_forward.1} parent=5 // pred_region
        %s252 = ssub.s32 %s18, 1
        // Predicated region
        $region13: #{convnet_forward.1} parent=11 // pred_check
          %p253 = pneg %p65
        $region14: #{convnet_forward.1} parent=11 // pred_check_branch
          %255 = sbr.rel (%p253) target = $region16
        $region15: #{convnet_forward.1} parent=11 // pred_region
          _
        $region16: #{convnet_forward.1} parent=11 // pred_fallthru
          _
        // Predicated region
        $region17: #{convnet_forward.1} parent=11 // pred_check
          %p256 = pneg %p86
        $region18: #{convnet_forward.1} parent=11 // pred_check_branch
          %258 = sbr.rel (%p256) target = $region20
        $region19: #{convnet_forward.1} parent=11 // pred_region
          _
        $region20: #{convnet_forward.1} parent=11 // pred_fallthru
          _
        // Predicated region
        $region21: #{convnet_forward.1} parent=11 // pred_check
          %p259 = pneg %p107
        $region22: #{convnet_forward.1} parent=11 // pred_check_branch
          %261 = sbr.rel (%p259) target = $region24
        $region23: #{convnet_forward.1} parent=11 // pred_region
          _
        $region24: #{convnet_forward.1} parent=11 // pred_fallthru
          _
        // Predicated region
        $region25: #{convnet_forward.1} parent=11 // pred_check
          %p262 = pneg %p128
        $region26: #{convnet_forward.1} parent=11 // pred_check_branch
          %264 = sbr.rel (%p262) target = $region28
        $region27: #{convnet_forward.1} parent=11 // pred_region
          _
        $region28: #{convnet_forward.1} parent=11 // pred_fallthru
          _
        // Predicated region
        $region29: #{convnet_forward.1} parent=11 // pred_check
          %p265 = pneg %p149
        $region30: #{convnet_forward.1} parent=11 // pred_check_branch
          %267 = sbr.rel (%p265) target = $region32
        $region31: #{convnet_forward.1} parent=11 // pred_region
          _
        $region32: #{convnet_forward.1} parent=11 // pred_fallthru
          _
        // Predicated region
        $region33: #{convnet_forward.1} parent=11 // pred_check
          %p268 = pneg %p170
        $region34: #{convnet_forward.1} parent=11 // pred_check_branch
          %270 = sbr.rel (%p268) target = $region36
        $region35: #{convnet_forward.1} parent=11 // pred_region
          _
        $region36: #{convnet_forward.1} parent=11 // pred_fallthru
          _
        // Predicated region
        $region37: #{convnet_forward.1} parent=11 // pred_check
          %p271 = pneg %p191
        $region38: #{convnet_forward.1} parent=11 // pred_check_branch
          %273 = sbr.rel (%p271) target = $region40
        $region39: #{convnet_forward.1} parent=11 // pred_region
          _
        $region40: #{convnet_forward.1} parent=11 // pred_fallthru
          _
        // Predicated region
        $region41: #{convnet_forward.1} parent=11 // pred_check
          %p274 = pneg %p212
        $region42: #{convnet_forward.1} parent=11 // pred_check_branch
          %276 = sbr.rel (%p274) target = $region44
        $region43: #{convnet_forward.1} parent=11 // pred_region
          _
        $region44: #{convnet_forward.1} parent=11 // pred_fallthru
          _
      $region12: #{convnet_forward.1} parent=5 // pred_fallthru
        _
      %p277 = scmp.lt.s32.totalorder %s18, 2
      // Predicated region
      $region45: #{convnet_forward.1} parent=5 // pred_check
        %p278 = pneg %p277
      $region46: #{convnet_forward.1} parent=5 // pred_check_branch
        %280 = sbr.rel (%p278) target = $region48
      $region47: #{convnet_forward.1} parent=5 // pred_region
        // Predicated region
        $region49: #{convnet_forward.1} parent=47 // pred_check
          %p281 = pneg %p38
        $region50: #{convnet_forward.1} parent=47 // pred_check_branch
          %283 = sbr.rel (%p281) target = $region52
        $region51: #{convnet_forward.1} parent=47 // pred_region
          %p284 = scmp.lt.s32.totalorder %s18, 1
          %s285 = scalar_select %p284, %s18, 1
          %s286 = smul.addr %s285, 4
          %s287 = smul.addr %s286, 8
          %s288 = scalar_lea.vmem %s0, %s287
        $region52: #{convnet_forward.1} parent=47 // pred_fallthru
          _
      $region48: #{convnet_forward.1} parent=5 // pred_fallthru
        _
      %p289 = scmp.le.s32.totalorder 1, %s18
      %p290 = scmp.lt.s32.totalorder %s18, 3
      %p291 = pnand %p289, %p290
      %p292 = pneg %p291
      // Predicated region
      $region53: #{convnet_forward.1} parent=5 // pred_check
        _
      $region54: #{convnet_forward.1} parent=5 // pred_check_branch
        %294 = sbr.rel (%p291) target = $region56
      $region55: #{convnet_forward.1} parent=5 // pred_region
        %s295 = ssub.s32 %s18, 1
        %p296 = scmp.lt.s32.totalorder %s23, 1
        %s297 = scalar_select %p296, %s23, 1
        %s298 = smul.addr %s297, 4
        %s299 = smul.addr %s298, 8
        %s300 = scalar_lea.vmem %s0, %s299
        %p301 = pneg %p44
        %p302 = pneg %p41
        %p303 = pneg %p65
        %p304 = pneg %p62
        %p305 = pneg %p86
        %p306 = pneg %p83
        %p307 = pneg %p107
        %p308 = pneg %p104
        %p309 = pneg %p128
        %p310 = pneg %p125
        %p311 = pneg %p149
        %p312 = pneg %p146
        %p313 = pneg %p170
        %p314 = pneg %p167
        %p315 = pneg %p191
        %p316 = pneg %p188
        %p317 = pneg %p212
        %p318 = pneg %p209
        %p319 = pneg %p238
        %p320 = pneg %p235
        %s321 = sand.u32 %s225, 1
        %s322 = scalar_lea.sflag [#allocation4], %s321
        %s323 = sand.u32 %s225, 1
        %s324 = scalar_lea.vmem [#allocation3], %s323
        %p325 = scmp.lt.s32.totalorder %s23, 1
        %s326 = scalar_select %p325, %s23, 1
        %s327 = smul.addr %s326, 4
        %s328 = smul.addr %s327, 8
        %s329 = scalar_lea.vmem %s0, %s328
        %v330 = vld [vmem:[%s329] sm:$0xff]
        %v331 = vld [vmem:[%s329 + $0x8] sm:$0xff]
        %v332 = vld [vmem:[%s329 + $0x10] sm:$0xff]
        %v333 = vld [vmem:[%s1] sm:$0xff]
        %v334 = vld [vmem:[%s1 + $0x8] sm:$0xff]
        %v335 = vld [vmem:[%s1 + $0x10] sm:$0xff]
        %v336 = vld [vmem:[%s1 + $0x18] sm:$0xff]
        %v337 = vld [vmem:[%s1 + $0x20] sm:$0xff]
        %v338 = vld [vmem:[%s1 + $0x28] sm:$0xff]
        %v339 = vld [vmem:[%s1 + $0x30] sm:$0xf]
        %v340 = vld [vmem:[%s1 + $0x38] sm:$0xf]
        %v341 = vld [vmem:[%s329 + $0x1] sm:$0xff]
        %v342 = vld [vmem:[%s329 + $0x9] sm:$0xff]
        %v343 = vld [vmem:[%s329 + $0x11] sm:$0xff]
        %s344 = scalar_lea.vmem %s1, 64
        %v345 = vld [vmem:[%s344] sm:$0xff]
        %v346 = vld [vmem:[%s344 + $0x8] sm:$0xff]
        %v347 = vld [vmem:[%s344 + $0x10] sm:$0xff]
        %v348 = vld [vmem:[%s344 + $0x18] sm:$0xff]
        %v349 = vld [vmem:[%s344 + $0x20] sm:$0xff]
        %v350 = vld [vmem:[%s344 + $0x28] sm:$0xff]
        %v351 = vld [vmem:[%s344 + $0x30] sm:$0xf]
        %v352 = vld [vmem:[%s344 + $0x38] sm:$0xf]
        %vm353 = vcmask 228352
        %v355 = vsel %vm353, %v341, 0
        %v358 = vsel %vm353, %v342, 0
        %v361 = vsel %vm353, %v343, 0
        %vm363 = vcmask 1043456
        %v365 = vsel %vm363, %v351, 0
        %v368 = vsel %vm363, %v352, 0
        %370 = vmatpush.msra.mxu0 0.0
        %371 = vmatpush.msra.mxu0 0.0
        %372 = vmatpush.msra.mxu0 0.0
        %373 = vmatpush.msra.mxu0 0.0
        %374 = vmatpush.msra.mxu0 0.0
        %375 = vmatpush.msra.mxu0 0.0
        %376 = vmatpush.msra.mxu0 0.0
        %377 = vmatpush.msra.mxu0 0.0
        %378 = vmatpush.msra.mxu0 0.0
        %379 = vmatpush.msra.mxu0 0.0
        %380 = vmatpush.msra.mxu0 0.0
        %381 = vmatpush.msra.mxu0 0.0
        %382 = vmatpush.msra.mxu0 %v365
        %383 = vmatpush.msra.mxu0 %v349
        %384 = vmatpush.msra.mxu0 %v347
        %385 = vmatpush.msra.mxu0 %v345
        %386 = vmatmul.f32.gmra.mxu0 %v355
        %v387 = vpop.f32.mrf.mxu0
        %v388 = vadd.f32 0.0, %v387
        %389 = vmatmul.f32.gmra.mxu0 %v358
        %v390 = vpop.f32.mrf.mxu0
        %v391 = vadd.f32 0.0, %v390
        %392 = vmatmul.f32.gmra.mxu0 %v361
        %v393 = vpop.f32.mrf.mxu0
        %v394 = vadd.f32 0.0, %v393
        %395 = vdwg.mxu0
        %396 = vmatpush.msra.mxu0 0.0
        %397 = vmatpush.msra.mxu0 0.0
        %398 = vmatpush.msra.mxu0 0.0
        %399 = vmatpush.msra.mxu0 0.0
        %400 = vmatpush.msra.mxu0 0.0
        %401 = vmatpush.msra.mxu0 0.0
        %402 = vmatpush.msra.mxu0 0.0
        %403 = vmatpush.msra.mxu0 0.0
        %404 = vmatpush.msra.mxu0 0.0
        %405 = vmatpush.msra.mxu0 0.0
        %406 = vmatpush.msra.mxu0 0.0
        %407 = vmatpush.msra.mxu0 0.0
        %408 = vmatpush.msra.mxu0 %v368
        %409 = vmatpush.msra.mxu0 %v350
        %410 = vmatpush.msra.mxu0 %v348
        %411 = vmatpush.msra.mxu0 %v346
        %412 = vmatmul.f32.gmra.mxu0 %v355
        %v413 = vpop.f32.mrf.mxu0
        %v414 = vadd.f32 0.0, %v413
        %415 = vmatmul.f32.gmra.mxu0 %v358
        %v416 = vpop.f32.mrf.mxu0
        %v417 = vadd.f32 0.0, %v416
        %418 = vmatmul.f32.gmra.mxu0 %v361
        %v419 = vpop.f32.mrf.mxu0
        %v420 = vadd.f32 0.0, %v419
        %421 = vdwg.mxu0
        %v423 = vsel %vm353, %v330, 0
        %v426 = vsel %vm353, %v331, 0
        %v429 = vsel %vm353, %v332, 0
        %v432 = vsel %vm363, %v339, 0
        %v435 = vsel %vm363, %v340, 0
        %437 = vmatpush.msra.mxu0 0.0
        %438 = vmatpush.msra.mxu0 0.0
        %439 = vmatpush.msra.mxu0 0.0
        %440 = vmatpush.msra.mxu0 0.0
        %441 = vmatpush.msra.mxu0 0.0
        %442 = vmatpush.msra.mxu0 0.0
        %443 = vmatpush.msra.mxu0 0.0
        %444 = vmatpush.msra.mxu0 0.0
        %445 = vmatpush.msra.mxu0 0.0
        %446 = vmatpush.msra.mxu0 0.0
        %447 = vmatpush.msra.mxu0 0.0
        %448 = vmatpush.msra.mxu0 0.0
        %449 = vmatpush.msra.mxu0 %v432
        %450 = vmatpush.msra.mxu0 %v337
        %451 = vmatpush.msra.mxu0 %v335
        %452 = vmatpush.msra.mxu0 %v333
        %453 = vmatmul.f32.gmra.mxu0 %v423
        %v454 = vpop.f32.mrf.mxu0
        %v455 = vadd.f32 %v388, %v454
        %456 = vmatmul.f32.gmra.mxu0 %v426
        %v457 = vpop.f32.mrf.mxu0
        %v458 = vadd.f32 %v391, %v457
        %459 = vmatmul.f32.gmra.mxu0 %v429
        %v460 = vpop.f32.mrf.mxu0
        %v461 = vadd.f32 %v394, %v460
        %462 = vdwg.mxu0
        %463 = vmatpush.msra.mxu0 0.0
        %464 = vmatpush.msra.mxu0 0.0
        %465 = vmatpush.msra.mxu0 0.0
        %466 = vmatpush.msra.mxu0 0.0
        %467 = vmatpush.msra.mxu0 0.0
        %468 = vmatpush.msra.mxu0 0.0
        %469 = vmatpush.msra.mxu0 0.0
        %470 = vmatpush.msra.mxu0 0.0
        %471 = vmatpush.msra.mxu0 0.0
        %472 = vmatpush.msra.mxu0 0.0
        %473 = vmatpush.msra.mxu0 0.0
        %474 = vmatpush.msra.mxu0 0.0
        %475 = vmatpush.msra.mxu0 %v435
        %476 = vmatpush.msra.mxu0 %v338
        %477 = vmatpush.msra.mxu0 %v336
        %478 = vmatpush.msra.mxu0 %v334
        %479 = vmatmul.f32.gmra.mxu0 %v423
        %v480 = vpop.f32.mrf.mxu0
        %v481 = vadd.f32 %v414, %v480
        %482 = vmatmul.f32.gmra.mxu0 %v426
        %v483 = vpop.f32.mrf.mxu0
        %v484 = vadd.f32 %v417, %v483
        %485 = vmatmul.f32.gmra.mxu0 %v429
        %v486 = vpop.f32.mrf.mxu0
        %v487 = vadd.f32 %v420, %v486
        %488 = vdwg.mxu0
        %v489 = vld [vmem:[%s329 + $0x2] sm:$0xff]
        %v490 = vld [vmem:[%s329 + $0xa] sm:$0xff]
        %v491 = vld [vmem:[%s329 + $0x12] sm:$0xff]
        %s492 = scalar_lea.vmem %s1, 128
        %v493 = vld [vmem:[%s492] sm:$0xff]
        %v494 = vld [vmem:[%s492 + $0x8] sm:$0xff]
        %v495 = vld [vmem:[%s492 + $0x10] sm:$0xff]
        %v496 = vld [vmem:[%s492 + $0x18] sm:$0xff]
        %v497 = vld [vmem:[%s492 + $0x20] sm:$0xff]
        %v498 = vld [vmem:[%s492 + $0x28] sm:$0xff]
        %v499 = vld [vmem:[%s492 + $0x30] sm:$0xf]
        %v500 = vld [vmem:[%s492 + $0x38] sm:$0xf]
        %v502 = vsel %vm353, %v489, 0
        %v505 = vsel %vm353, %v490, 0
        %v508 = vsel %vm353, %v491, 0
        %v511 = vsel %vm363, %v499, 0
        %v514 = vsel %vm363, %v500, 0
        %516 = vmatpush.msra.mxu0 0.0
        %517 = vmatpush.msra.mxu0 0.0
        %518 = vmatpush.msra.mxu0 0.0
        %519 = vmatpush.msra.mxu0 0.0
        %520 = vmatpush.msra.mxu0 0.0
        %521 = vmatpush.msra.mxu0 0.0
        %522 = vmatpush.msra.mxu0 0.0
        %523 = vmatpush.msra.mxu0 0.0
        %524 = vmatpush.msra.mxu0 0.0
        %525 = vmatpush.msra.mxu0 0.0
        %526 = vmatpush.msra.mxu0 0.0
        %527 = vmatpush.msra.mxu0 0.0
        %528 = vmatpush.msra.mxu0 %v511
        %529 = vmatpush.msra.mxu0 %v497
        %530 = vmatpush.msra.mxu0 %v495
        %531 = vmatpush.msra.mxu0 %v493
        %532 = vmatmul.f32.gmra.mxu0 %v502
        %v533 = vpop.f32.mrf.mxu0
        %v534 = vadd.f32 0.0, %v533
        %535 = vmatmul.f32.gmra.mxu0 %v505
        %v536 = vpop.f32.mrf.mxu0
        %v537 = vadd.f32 0.0, %v536
        %538 = vmatmul.f32.gmra.mxu0 %v508
        %v539 = vpop.f32.mrf.mxu0
        %v540 = vadd.f32 0.0, %v539
        %541 = vdwg.mxu0
        %542 = vmatpush.msra.mxu0 0.0
        %543 = vmatpush.msra.mxu0 0.0
        %544 = vmatpush.msra.mxu0 0.0
        %545 = vmatpush.msra.mxu0 0.0
        %546 = vmatpush.msra.mxu0 0.0
        %547 = vmatpush.msra.mxu0 0.0
        %548 = vmatpush.msra.mxu0 0.0
        %549 = vmatpush.msra.mxu0 0.0
        %550 = vmatpush.msra.mxu0 0.0
        %551 = vmatpush.msra.mxu0 0.0
        %552 = vmatpush.msra.mxu0 0.0
        %553 = vmatpush.msra.mxu0 0.0
        %554 = vmatpush.msra.mxu0 %v514
        %555 = vmatpush.msra.mxu0 %v498
        %556 = vmatpush.msra.mxu0 %v496
        %557 = vmatpush.msra.mxu0 %v494
        %558 = vmatmul.f32.gmra.mxu0 %v502
        %v559 = vpop.f32.mrf.mxu0
        %v560 = vadd.f32 0.0, %v559
        %561 = vmatmul.f32.gmra.mxu0 %v505
        %v562 = vpop.f32.mrf.mxu0
        %v563 = vadd.f32 0.0, %v562
        %564 = vmatmul.f32.gmra.mxu0 %v508
        %v565 = vpop.f32.mrf.mxu0
        %v566 = vadd.f32 0.0, %v565
        %567 = vdwg.mxu0
        %v568 = vadd.f32 %v455, %v534
        %v569 = vadd.f32 %v481, %v560
        %v570 = vadd.f32 %v458, %v537
        %v571 = vadd.f32 %v484, %v563
        %v572 = vadd.f32 %v461, %v540
        %v573 = vadd.f32 %v487, %v566
        %v574 = vld [vmem:[%s329 + $0x3] sm:$0xff]
        %v575 = vld [vmem:[%s329 + $0xb] sm:$0xff]
        %v576 = vld [vmem:[%s329 + $0x13] sm:$0xff]
        %s577 = scalar_lea.vmem %s1, 192
        %v578 = vld [vmem:[%s577] sm:$0xff]
        %v579 = vld [vmem:[%s577 + $0x8] sm:$0xff]
        %v580 = vld [vmem:[%s577 + $0x10] sm:$0xff]
        %v581 = vld [vmem:[%s577 + $0x18] sm:$0xff]
        %v582 = vld [vmem:[%s577 + $0x20] sm:$0xff]
        %v583 = vld [vmem:[%s577 + $0x28] sm:$0xff]
        %v584 = vld [vmem:[%s577 + $0x30] sm:$0xf]
        %v585 = vld [vmem:[%s577 + $0x38] sm:$0xf]
        %v587 = vsel %vm353, %v574, 0
        %v590 = vsel %vm353, %v575, 0
        %v593 = vsel %vm353, %v576, 0
        %v596 = vsel %vm363, %v584, 0
        %v599 = vsel %vm363, %v585, 0
        %601 = vmatpush.msra.mxu0 0.0
        %602 = vmatpush.msra.mxu0 0.0
        %603 = vmatpush.msra.mxu0 0.0
        %604 = vmatpush.msra.mxu0 0.0
        %605 = vmatpush.msra.mxu0 0.0
        %606 = vmatpush.msra.mxu0 0.0
        %607 = vmatpush.msra.mxu0 0.0
        %608 = vmatpush.msra.mxu0 0.0
        %609 = vmatpush.msra.mxu0 0.0
        %610 = vmatpush.msra.mxu0 0.0
        %611 = vmatpush.msra.mxu0 0.0
        %612 = vmatpush.msra.mxu0 0.0
        %613 = vmatpush.msra.mxu0 %v596
        %614 = vmatpush.msra.mxu0 %v582
        %615 = vmatpush.msra.mxu0 %v580
        %616 = vmatpush.msra.mxu0 %v578
        %617 = vmatmul.f32.gmra.mxu0 %v587
        %v618 = vpop.f32.mrf.mxu0
        %v619 = vadd.f32 0.0, %v618
        %620 = vmatmul.f32.gmra.mxu0 %v590
        %v621 = vpop.f32.mrf.mxu0
        %v622 = vadd.f32 0.0, %v621
        %623 = vmatmul.f32.gmra.mxu0 %v593
        %v624 = vpop.f32.mrf.mxu0
        %v625 = vadd.f32 0.0, %v624
        %626 = vdwg.mxu0
        %627 = vmatpush.msra.mxu0 0.0
        %628 = vmatpush.msra.mxu0 0.0
        %629 = vmatpush.msra.mxu0 0.0
        %630 = vmatpush.msra.mxu0 0.0
        %631 = vmatpush.msra.mxu0 0.0
        %632 = vmatpush.msra.mxu0 0.0
        %633 = vmatpush.msra.mxu0 0.0
        %634 = vmatpush.msra.mxu0 0.0
        %635 = vmatpush.msra.mxu0 0.0
        %636 = vmatpush.msra.mxu0 0.0
        %637 = vmatpush.msra.mxu0 0.0
        %638 = vmatpush.msra.mxu0 0.0
        %639 = vmatpush.msra.mxu0 %v599
        %640 = vmatpush.msra.mxu0 %v583
        %641 = vmatpush.msra.mxu0 %v581
        %642 = vmatpush.msra.mxu0 %v579
        %643 = vmatmul.f32.gmra.mxu0 %v587
        %v644 = vpop.f32.mrf.mxu0
        %v645 = vadd.f32 0.0, %v644
        %646 = vmatmul.f32.gmra.mxu0 %v590
        %v647 = vpop.f32.mrf.mxu0
        %v648 = vadd.f32 0.0, %v647
        %649 = vmatmul.f32.gmra.mxu0 %v593
        %v650 = vpop.f32.mrf.mxu0
        %v651 = vadd.f32 0.0, %v650
        %652 = vdwg.mxu0
        %v653 = vadd.f32 %v568, %v619
        %v654 = vadd.f32 %v569, %v645
        %v655 = vadd.f32 %v570, %v622
        %v656 = vadd.f32 %v571, %v648
        %v657 = vadd.f32 %v572, %v625
        %v658 = vadd.f32 %v573, %v651
        %v659 = vld [vmem:[%s329 + $0x4] sm:$0xff]
        %v660 = vld [vmem:[%s329 + $0xc] sm:$0xff]
        %v661 = vld [vmem:[%s329 + $0x14] sm:$0xff]
        %s662 = scalar_lea.vmem %s1, 256
        %v663 = vld [vmem:[%s662] sm:$0xff]
        %v664 = vld [vmem:[%s662 + $0x8] sm:$0xff]
        %v665 = vld [vmem:[%s662 + $0x10] sm:$0xff]
        %v666 = vld [vmem:[%s662 + $0x18] sm:$0xff]
        %v667 = vld [vmem:[%s662 + $0x20] sm:$0xff]
        %v668 = vld [vmem:[%s662 + $0x28] sm:$0xff]
        %v669 = vld [vmem:[%s662 + $0x30] sm:$0xf]
        %v670 = vld [vmem:[%s662 + $0x38] sm:$0xf]
        %v672 = vsel %vm353, %v659, 0
        %v675 = vsel %vm353, %v660, 0
        %v678 = vsel %vm353, %v661, 0
        %v681 = vsel %vm363, %v669, 0
        %v684 = vsel %vm363, %v670, 0
        %686 = vmatpush.msra.mxu0 0.0
        %687 = vmatpush.msra.mxu0 0.0
        %688 = vmatpush.msra.mxu0 0.0
        %689 = vmatpush.msra.mxu0 0.0
        %690 = vmatpush.msra.mxu0 0.0
        %691 = vmatpush.msra.mxu0 0.0
        %692 = vmatpush.msra.mxu0 0.0
        %693 = vmatpush.msra.mxu0 0.0
        %694 = vmatpush.msra.mxu0 0.0
        %695 = vmatpush.msra.mxu0 0.0
        %696 = vmatpush.msra.mxu0 0.0
        %697 = vmatpush.msra.mxu0 0.0
        %698 = vmatpush.msra.mxu0 %v681
        %699 = vmatpush.msra.mxu0 %v667
        %700 = vmatpush.msra.mxu0 %v665
        %701 = vmatpush.msra.mxu0 %v663
        %702 = vmatmul.f32.gmra.mxu0 %v672
        %v703 = vpop.f32.mrf.mxu0
        %v704 = vadd.f32 0.0, %v703
        %705 = vmatmul.f32.gmra.mxu0 %v675
        %v706 = vpop.f32.mrf.mxu0
        %v707 = vadd.f32 0.0, %v706
        %708 = vmatmul.f32.gmra.mxu0 %v678
        %v709 = vpop.f32.mrf.mxu0
        %v710 = vadd.f32 0.0, %v709
        %711 = vdwg.mxu0
        %712 = vmatpush.msra.mxu0 0.0
        %713 = vmatpush.msra.mxu0 0.0
        %714 = vmatpush.msra.mxu0 0.0
        %715 = vmatpush.msra.mxu0 0.0
        %716 = vmatpush.msra.mxu0 0.0
        %717 = vmatpush.msra.mxu0 0.0
        %718 = vmatpush.msra.mxu0 0.0
        %719 = vmatpush.msra.mxu0 0.0
        %720 = vmatpush.msra.mxu0 0.0
        %721 = vmatpush.msra.mxu0 0.0
        %722 = vmatpush.msra.mxu0 0.0
        %723 = vmatpush.msra.mxu0 0.0
        %724 = vmatpush.msra.mxu0 %v684
        %725 = vmatpush.msra.mxu0 %v668
        %726 = vmatpush.msra.mxu0 %v666
        %727 = vmatpush.msra.mxu0 %v664
        %728 = vmatmul.f32.gmra.mxu0 %v672
        %v729 = vpop.f32.mrf.mxu0
        %v730 = vadd.f32 0.0, %v729
        %731 = vmatmul.f32.gmra.mxu0 %v675
        %v732 = vpop.f32.mrf.mxu0
        %v733 = vadd.f32 0.0, %v732
        %734 = vmatmul.f32.gmra.mxu0 %v678
        %v735 = vpop.f32.mrf.mxu0
        %v736 = vadd.f32 0.0, %v735
        %737 = vdwg.mxu0
        %v738 = vadd.f32 %v653, %v704
        %v739 = vadd.f32 %v654, %v730
        %v740 = vadd.f32 %v655, %v707
        %v741 = vadd.f32 %v656, %v733
        %v742 = vadd.f32 %v657, %v710
        %v743 = vadd.f32 %v658, %v736
        %v744 = vld [vmem:[%s2] sm:$0x3]
        %v746 = vperm.slane %v744, 0
        %v747 = vperm.slane %v744, 1
        %v750 = vadd.f32 %v738, %v746
        %v751 = vadd.f32 %v739, %v747
        %v752 = vadd.f32 %v740, %v746
        %v753 = vadd.f32 %v741, %v747
        %v754 = vadd.f32 %v742, %v746
        %v755 = vadd.f32 %v743, %v747
        %v756 = vmax.f32 %v750, 0.0
        %v757 = vmax.f32 %v751, 0.0
        %v758 = vmax.f32 %v752, 0.0
        %v759 = vmax.f32 %v753, 0.0
        %v760 = vmax.f32 %v754, 0.0
        %v761 = vmax.f32 %v755, 0.0
        %vm768 = vcmask 1046528
        %v769 = vrot.slane %v756, 1
        %v770 = vrot.slane %v758, 1
        %v771 = vsel %vm768, %v769, %v770
        %v772 = vrot.slane %v757, 1
        %v773 = vrot.slane %v759, 1
        %v774 = vsel %vm768, %v772, %v773
        %v775 = vrot.slane %v760, 1
        %v776 = vsel %vm768, %v770, %v775
        %v777 = vrot.slane %v761, 1
        %v778 = vsel %vm768, %v773, %v777
        %v785 = vmax.f32 %v756, %v771
        %v786 = vmax.f32 %v757, %v774
        %v787 = vmax.f32 %v758, %v776
        %v788 = vmax.f32 %v759, %v778
        %v789 = vmax.f32 %v760, %v775
        %v790 = vmax.f32 %v761, %v777
        %797 = vrot.lane.b32.xlu0 %v785, 118
        %v798 = vpop.permute.xlu0 %797
        %799 = vrot.lane.b32.xlu0 %v786, 118
        %v800 = vpop.permute.xlu0 %799
        %801 = vrot.lane.b32.xlu0 %v787, 118
        %v802 = vpop.permute.xlu0 %801
        %803 = vrot.lane.b32.xlu0 %v788, 118
        %v804 = vpop.permute.xlu0 %803
        %805 = vrot.lane.b32.xlu0 %v789, 118
        %v806 = vpop.permute.xlu0 %805
        %807 = vrot.lane.b32.xlu0 %v790, 118
        %v808 = vpop.permute.xlu0 %807
        %vm809 = vcmask 965632
        %v810 = vsel %vm809, %v798, %v800
        %v811 = vsel %vm809, %v802, %v804
        %v812 = vsel %vm809, %v806, %v808
        %v819 = vmax.f32 %v785, %v810
        %v820 = vmax.f32 %v786, %v800
        %v821 = vmax.f32 %v787, %v811
        %v822 = vmax.f32 %v788, %v804
        %v823 = vmax.f32 %v789, %v812
        %v824 = vmax.f32 %v790, %v808
        %v825 = vld [vmem:[%s3] sm:$0xff]
        %v826 = vld [vmem:[%s3 + $0x8] sm:$0xff]
        %v827 = vld [vmem:[%s3 + $0x10] sm:$0xff]
        %v828 = vld [vmem:[%s3 + $0x18] sm:$0xff]
        %v829 = vld [vmem:[%s3 + $0x20] sm:$0xff]
        %v830 = vld [vmem:[%s3 + $0x28] sm:$0xff]
        %v831 = vld [vmem:[%s3 + $0x30] sm:$0xff]
        %v832 = vld [vmem:[%s3 + $0x38] sm:$0xff]
        %v833 = vld [vmem:[%s3 + $0x40] sm:$0xff]
        %v834 = vld [vmem:[%s3 + $0x48] sm:$0xff]
        %v835 = vld [vmem:[%s3 + $0x50] sm:$0xff]
        %v836 = vld [vmem:[%s3 + $0x58] sm:$0xff]
        %v837 = vld [vmem:[%s3 + $0x60] sm:$0xff]
        %v838 = vld [vmem:[%s3 + $0x68] sm:$0xff]
        %v839 = vld [vmem:[%s3 + $0x70] sm:$0xff]
        %v840 = vld [vmem:[%s3 + $0x78] sm:$0xff]
        %v841 = vld [vmem:[%s3 + $0x80] sm:$0xff]
        %v842 = vld [vmem:[%s3 + $0x88] sm:$0xff]
        %v843 = vld [vmem:[%s3 + $0x90] sm:$0xff]
        %v844 = vld [vmem:[%s3 + $0x98] sm:$0xff]
        %v845 = vld [vmem:[%s3 + $0xa0] sm:$0xff]
        %v846 = vld [vmem:[%s3 + $0xa8] sm:$0xff]
        %v847 = vld [vmem:[%s3 + $0xb0] sm:$0xff]
        %v848 = vld [vmem:[%s3 + $0xb8] sm:$0xff]
        %v849 = vld [vmem:[%s3 + $0xc0] sm:$0xff]
        %v850 = vld [vmem:[%s3 + $0xc8] sm:$0xff]
        %v851 = vld [vmem:[%s3 + $0xd0] sm:$0xff]
        %v852 = vld [vmem:[%s3 + $0xd8] sm:$0xff]
        %v853 = vld [vmem:[%s3 + $0xe0] sm:$0xff]
        %v854 = vld [vmem:[%s3 + $0xe8] sm:$0xff]
        %v855 = vld [vmem:[%s3 + $0xf0] sm:$0xff]
        %v856 = vld [vmem:[%s3 + $0xf8] sm:$0xff]
        %v857 = vld [vmem:[%s3 + $0x100] sm:$0xff]
        %v858 = vld [vmem:[%s3 + $0x108] sm:$0xff]
        %v859 = vld [vmem:[%s3 + $0x110] sm:$0xff]
        %v860 = vld [vmem:[%s3 + $0x118] sm:$0xff]
        %v861 = vld [vmem:[%s3 + $0x120] sm:$0xff]
        %v862 = vld [vmem:[%s3 + $0x128] sm:$0xff]
        %v863 = vld [vmem:[%s3 + $0x130] sm:$0xff]
        %v864 = vld [vmem:[%s3 + $0x138] sm:$0xff]
        %v865 = vld [vmem:[%s3 + $0x140] sm:$0xff]
        %v866 = vld [vmem:[%s3 + $0x148] sm:$0xff]
        %v867 = vld [vmem:[%s3 + $0x150] sm:$0xff]
        %v868 = vld [vmem:[%s3 + $0x158] sm:$0xff]
        %v869 = vld [vmem:[%s3 + $0x160] sm:$0xff]
        %v870 = vld [vmem:[%s3 + $0x168] sm:$0xff]
        %v871 = vld [vmem:[%s3 + $0x170] sm:$0xff]
        %v872 = vld [vmem:[%s3 + $0x178] sm:$0xff]
        %v873 = vld [vmem:[%s3 + $0x180] sm:$0xff]
        %v874 = vld [vmem:[%s3 + $0x188] sm:$0xff]
        %v875 = vld [vmem:[%s3 + $0x190] sm:$0xff]
        %v876 = vld [vmem:[%s3 + $0x198] sm:$0xff]
        %v877 = vld [vmem:[%s3 + $0x1a0] sm:$0xff]
        %v878 = vld [vmem:[%s3 + $0x1a8] sm:$0xff]
        %v879 = vld [vmem:[%s3 + $0x1b0] sm:$0xff]
        %v880 = vld [vmem:[%s3 + $0x1b8] sm:$0xff]
        %v881 = vld [vmem:[%s3 + $0x1c0] sm:$0x3f]
        %v882 = vld [vmem:[%s3 + $0x1c8] sm:$0x3f]
        %s883 = scalar_lea.vmem %s3, 464
        %v884 = vld [vmem:[%s883] sm:$0xff]
        %v885 = vld [vmem:[%s883 + $0x8] sm:$0xff]
        %v886 = vld [vmem:[%s883 + $0x10] sm:$0xff]
        %v887 = vld [vmem:[%s883 + $0x18] sm:$0xff]
        %v888 = vld [vmem:[%s883 + $0x20] sm:$0xff]
        %v889 = vld [vmem:[%s883 + $0x28] sm:$0xff]
        %v890 = vld [vmem:[%s883 + $0x30] sm:$0xff]
        %v891 = vld [vmem:[%s883 + $0x38] sm:$0xff]
        %v892 = vld [vmem:[%s883 + $0x40] sm:$0xff]
        %v893 = vld [vmem:[%s883 + $0x48] sm:$0xff]
        %v894 = vld [vmem:[%s883 + $0x50] sm:$0xff]
        %v895 = vld [vmem:[%s883 + $0x58] sm:$0xff]
        %v896 = vld [vmem:[%s883 + $0x60] sm:$0xff]
        %v897 = vld [vmem:[%s883 + $0x68] sm:$0xff]
        %v898 = vld [vmem:[%s883 + $0x70] sm:$0xff]
        %v899 = vld [vmem:[%s883 + $0x78] sm:$0xff]
        %v900 = vld [vmem:[%s883 + $0x80] sm:$0xff]
        %v901 = vld [vmem:[%s883 + $0x88] sm:$0xff]
        %v902 = vld [vmem:[%s883 + $0x90] sm:$0xff]
        %v903 = vld [vmem:[%s883 + $0x98] sm:$0xff]
        %v904 = vld [vmem:[%s883 + $0xa0] sm:$0xff]
        %v905 = vld [vmem:[%s883 + $0xa8] sm:$0xff]
        %v906 = vld [vmem:[%s883 + $0xb0] sm:$0xff]
        %v907 = vld [vmem:[%s883 + $0xb8] sm:$0xff]
        %v908 = vld [vmem:[%s883 + $0xc0] sm:$0xff]
        %v909 = vld [vmem:[%s883 + $0xc8] sm:$0xff]
        %v910 = vld [vmem:[%s883 + $0xd0] sm:$0xff]
        %v911 = vld [vmem:[%s883 + $0xd8] sm:$0xff]
        %v912 = vld [vmem:[%s883 + $0xe0] sm:$0xff]
        %v913 = vld [vmem:[%s883 + $0xe8] sm:$0xff]
        %v914 = vld [vmem:[%s883 + $0xf0] sm:$0xff]
        %v915 = vld [vmem:[%s883 + $0xf8] sm:$0xff]
        %v916 = vld [vmem:[%s883 + $0x100] sm:$0xff]
        %v917 = vld [vmem:[%s883 + $0x108] sm:$0xff]
        %v918 = vld [vmem:[%s883 + $0x110] sm:$0xff]
        %v919 = vld [vmem:[%s883 + $0x118] sm:$0xff]
        %v920 = vld [vmem:[%s883 + $0x120] sm:$0xff]
        %v921 = vld [vmem:[%s883 + $0x128] sm:$0xff]
        %v922 = vld [vmem:[%s883 + $0x130] sm:$0xff]
        %v923 = vld [vmem:[%s883 + $0x138] sm:$0xff]
        %v924 = vld [vmem:[%s883 + $0x140] sm:$0xff]
        %v925 = vld [vmem:[%s883 + $0x148] sm:$0xff]
        %v926 = vld [vmem:[%s883 + $0x150] sm:$0xff]
        %v927 = vld [vmem:[%s883 + $0x158] sm:$0xff]
        %v928 = vld [vmem:[%s883 + $0x160] sm:$0xff]
        %v929 = vld [vmem:[%s883 + $0x168] sm:$0xff]
        %v930 = vld [vmem:[%s883 + $0x170] sm:$0xff]
        %v931 = vld [vmem:[%s883 + $0x178] sm:$0xff]
        %v932 = vld [vmem:[%s883 + $0x180] sm:$0xff]
        %v933 = vld [vmem:[%s883 + $0x188] sm:$0xff]
        %v934 = vld [vmem:[%s883 + $0x190] sm:$0xff]
        %v935 = vld [vmem:[%s883 + $0x198] sm:$0xff]
        %v936 = vld [vmem:[%s883 + $0x1a0] sm:$0xff]
        %v937 = vld [vmem:[%s883 + $0x1a8] sm:$0xff]
        %v938 = vld [vmem:[%s883 + $0x1b0] sm:$0xff]
        %v939 = vld [vmem:[%s883 + $0x1b8] sm:$0xff]
        %v940 = vld [vmem:[%s883 + $0x1c0] sm:$0x3f]
        %v941 = vld [vmem:[%s883 + $0x1c8] sm:$0x3f]
        %vm948 = vcmask 1045504
        %v949 = vrot.slane %v819, 2
        %v950 = vrot.slane %v821, 2
        %v951 = vsel %vm948, %v949, %v950
        %v952 = vrot.slane %v820, 2
        %v953 = vrot.slane %v822, 2
        %v954 = vsel %vm948, %v952, %v953
        %v955 = vrot.slane %v823, 2
        %v956 = vsel %vm948, %v950, %v955
        %v957 = vrot.slane %v824, 2
        %v958 = vsel %vm948, %v953, %v957
        %vm961 = vcmask 834560
        %v962 = vsel %vm961, %v954, 0
        %v964 = vsel %vm961, %v958, 0
        %v967 = vsel %vm948, %v940, 0
        %v970 = vsel %vm948, %v941, 0
        %972 = vmatpush.msra.mxu0 %v914
        %973 = vmatpush.msra.mxu0 %v912
        %974 = vmatpush.msra.mxu0 %v910
        %975 = vmatpush.msra.mxu0 %v908
        %976 = vmatpush.msra.mxu0 %v906
        %977 = vmatpush.msra.mxu0 %v904
        %978 = vmatpush.msra.mxu0 %v902
        %979 = vmatpush.msra.mxu0 %v900
        %980 = vmatpush.msra.mxu0 %v898
        %981 = vmatpush.msra.mxu0 %v896
        %982 = vmatpush.msra.mxu0 %v894
        %983 = vmatpush.msra.mxu0 %v892
        %984 = vmatpush.msra.mxu0 %v890
        %985 = vmatpush.msra.mxu0 %v888
        %986 = vmatpush.msra.mxu0 %v886
        %987 = vmatpush.msra.mxu0 %v884
        %988 = vmatmul.f32.gmra.mxu0 %v951
        %v989 = vpop.f32.mrf.mxu0
        %v990 = vadd.f32 0.0, %v989
        %991 = vmatmul.f32.gmra.mxu0 %v956
        %v992 = vpop.f32.mrf.mxu0
        %v993 = vadd.f32 0.0, %v992
        %994 = vdwg.mxu0
        %995 = vmatpush.msra.mxu0 0.0
        %996 = vmatpush.msra.mxu0 0.0
        %997 = vmatpush.msra.mxu0 0.0
        %998 = vmatpush.msra.mxu0 %v967
        %999 = vmatpush.msra.mxu0 %v938
        %1000 = vmatpush.msra.mxu0 %v936
        %1001 = vmatpush.msra.mxu0 %v934
        %1002 = vmatpush.msra.mxu0 %v932
        %1003 = vmatpush.msra.mxu0 %v930
        %1004 = vmatpush.msra.mxu0 %v928
        %1005 = vmatpush.msra.mxu0 %v926
        %1006 = vmatpush.msra.mxu0 %v924
        %1007 = vmatpush.msra.mxu0 %v922
        %1008 = vmatpush.msra.mxu0 %v920
        %1009 = vmatpush.msra.mxu0 %v918
        %1010 = vmatpush.msra.mxu0 %v916
        %1011 = vmatmul.f32.gmra.mxu0 %v962
        %v1012 = vpop.f32.mrf.mxu0
        %v1013 = vadd.f32 %v990, %v1012
        %1014 = vmatmul.f32.gmra.mxu0 %v964
        %v1015 = vpop.f32.mrf.mxu0
        %v1016 = vadd.f32 %v993, %v1015
        %1017 = vdwg.mxu0
        %1018 = vmatpush.msra.mxu0 %v915
        %1019 = vmatpush.msra.mxu0 %v913
        %1020 = vmatpush.msra.mxu0 %v911
        %1021 = vmatpush.msra.mxu0 %v909
        %1022 = vmatpush.msra.mxu0 %v907
        %1023 = vmatpush.msra.mxu0 %v905
        %1024 = vmatpush.msra.mxu0 %v903
        %1025 = vmatpush.msra.mxu0 %v901
        %1026 = vmatpush.msra.mxu0 %v899
        %1027 = vmatpush.msra.mxu0 %v897
        %1028 = vmatpush.msra.mxu0 %v895
        %1029 = vmatpush.msra.mxu0 %v893
        %1030 = vmatpush.msra.mxu0 %v891
        %1031 = vmatpush.msra.mxu0 %v889
        %1032 = vmatpush.msra.mxu0 %v887
        %1033 = vmatpush.msra.mxu0 %v885
        %1034 = vmatmul.f32.gmra.mxu0 %v951
        %v1035 = vpop.f32.mrf.mxu0
        %v1036 = vadd.f32 0.0, %v1035
        %1037 = vmatmul.f32.gmra.mxu0 %v956
        %v1038 = vpop.f32.mrf.mxu0
        %v1039 = vadd.f32 0.0, %v1038
        %1040 = vdwg.mxu0
        %1041 = vmatpush.msra.mxu0 0.0
        %1042 = vmatpush.msra.mxu0 0.0
        %1043 = vmatpush.msra.mxu0 0.0
        %1044 = vmatpush.msra.mxu0 %v970
        %1045 = vmatpush.msra.mxu0 %v939
        %1046 = vmatpush.msra.mxu0 %v937
        %1047 = vmatpush.msra.mxu0 %v935
        %1048 = vmatpush.msra.mxu0 %v933
        %1049 = vmatpush.msra.mxu0 %v931
        %1050 = vmatpush.msra.mxu0 %v929
        %1051 = vmatpush.msra.mxu0 %v927
        %1052 = vmatpush.msra.mxu0 %v925
        %1053 = vmatpush.msra.mxu0 %v923
        %1054 = vmatpush.msra.mxu0 %v921
        %1055 = vmatpush.msra.mxu0 %v919
        %1056 = vmatpush.msra.mxu0 %v917
        %1057 = vmatmul.f32.gmra.mxu0 %v962
        %v1058 = vpop.f32.mrf.mxu0
        %v1059 = vadd.f32 %v1036, %v1058
        %1060 = vmatmul.f32.gmra.mxu0 %v964
        %v1061 = vpop.f32.mrf.mxu0
        %v1062 = vadd.f32 %v1039, %v1061
        %1063 = vdwg.mxu0
        %v1064 = vsel %vm961, %v820, 0
        %v1066 = vsel %vm961, %v822, 0
        %v1069 = vsel %vm948, %v881, 0
        %v1072 = vsel %vm948, %v882, 0
        %1074 = vmatpush.msra.mxu0 %v855
        %1075 = vmatpush.msra.mxu0 %v853
        %1076 = vmatpush.msra.mxu0 %v851
        %1077 = vmatpush.msra.mxu0 %v849
        %1078 = vmatpush.msra.mxu0 %v847
        %1079 = vmatpush.msra.mxu0 %v845
        %1080 = vmatpush.msra.mxu0 %v843
        %1081 = vmatpush.msra.mxu0 %v841
        %1082 = vmatpush.msra.mxu0 %v839
        %1083 = vmatpush.msra.mxu0 %v837
        %1084 = vmatpush.msra.mxu0 %v835
        %1085 = vmatpush.msra.mxu0 %v833
        %1086 = vmatpush.msra.mxu0 %v831
        %1087 = vmatpush.msra.mxu0 %v829
        %1088 = vmatpush.msra.mxu0 %v827
        %1089 = vmatpush.msra.mxu0 %v825
        %1090 = vmatmul.f32.gmra.mxu0 %v819
        %v1091 = vpop.f32.mrf.mxu0
        %v1092 = vadd.f32 %v1013, %v1091
        %1093 = vmatmul.f32.gmra.mxu0 %v821
        %v1094 = vpop.f32.mrf.mxu0
        %v1095 = vadd.f32 %v1016, %v1094
        %1096 = vdwg.mxu0
        %1097 = vmatpush.msra.mxu0 0.0
        %1098 = vmatpush.msra.mxu0 0.0
        %1099 = vmatpush.msra.mxu0 0.0
        %1100 = vmatpush.msra.mxu0 %v1069
        %1101 = vmatpush.msra.mxu0 %v879
        %1102 = vmatpush.msra.mxu0 %v877
        %1103 = vmatpush.msra.mxu0 %v875
        %1104 = vmatpush.msra.mxu0 %v873
        %1105 = vmatpush.msra.mxu0 %v871
        %1106 = vmatpush.msra.mxu0 %v869
        %1107 = vmatpush.msra.mxu0 %v867
        %1108 = vmatpush.msra.mxu0 %v865
        %1109 = vmatpush.msra.mxu0 %v863
        %1110 = vmatpush.msra.mxu0 %v861
        %1111 = vmatpush.msra.mxu0 %v859
        %1112 = vmatpush.msra.mxu0 %v857
        %1113 = vmatmul.f32.gmra.mxu0 %v1064
        %v1114 = vpop.f32.mrf.mxu0
        %v1115 = vadd.f32 %v1092, %v1114
        %1116 = vmatmul.f32.gmra.mxu0 %v1066
        %v1117 = vpop.f32.mrf.mxu0
        %v1118 = vadd.f32 %v1095, %v1117
        %1119 = vdwg.mxu0
        %1120 = vmatpush.msra.mxu0 %v856
        %1121 = vmatpush.msra.mxu0 %v854
        %1122 = vmatpush.msra.mxu0 %v852
        %1123 = vmatpush.msra.mxu0 %v850
        %1124 = vmatpush.msra.mxu0 %v848
        %1125 = vmatpush.msra.mxu0 %v846
        %1126 = vmatpush.msra.mxu0 %v844
        %1127 = vmatpush.msra.mxu0 %v842
        %1128 = vmatpush.msra.mxu0 %v840
        %1129 = vmatpush.msra.mxu0 %v838
        %1130 = vmatpush.msra.mxu0 %v836
        %1131 = vmatpush.msra.mxu0 %v834
        %1132 = vmatpush.msra.mxu0 %v832
        %1133 = vmatpush.msra.mxu0 %v830
        %1134 = vmatpush.msra.mxu0 %v828
        %1135 = vmatpush.msra.mxu0 %v826
        %1136 = vmatmul.f32.gmra.mxu0 %v819
        %v1137 = vpop.f32.mrf.mxu0
        %v1138 = vadd.f32 %v1059, %v1137
        %1139 = vmatmul.f32.gmra.mxu0 %v821
        %v1140 = vpop.f32.mrf.mxu0
        %v1141 = vadd.f32 %v1062, %v1140
        %1142 = vdwg.mxu0
        %1143 = vmatpush.msra.mxu0 0.0
        %1144 = vmatpush.msra.mxu0 0.0
        %1145 = vmatpush.msra.mxu0 0.0
        %1146 = vmatpush.msra.mxu0 %v1072
        %1147 = vmatpush.msra.mxu0 %v880
        %1148 = vmatpush.msra.mxu0 %v878
        %1149 = vmatpush.msra.mxu0 %v876
        %1150 = vmatpush.msra.mxu0 %v874
        %1151 = vmatpush.msra.mxu0 %v872
        %1152 = vmatpush.msra.mxu0 %v870
        %1153 = vmatpush.msra.mxu0 %v868
        %1154 = vmatpush.msra.mxu0 %v866
        %1155 = vmatpush.msra.mxu0 %v864
        %1156 = vmatpush.msra.mxu0 %v862
        %1157 = vmatpush.msra.mxu0 %v860
        %1158 = vmatpush.msra.mxu0 %v858
        %1159 = vmatmul.f32.gmra.mxu0 %v1064
        %v1160 = vpop.f32.mrf.mxu0
        %v1161 = vadd.f32 %v1138, %v1160
        %1162 = vmatmul.f32.gmra.mxu0 %v1066
        %v1163 = vpop.f32.mrf.mxu0
        %v1164 = vadd.f32 %v1141, %v1163
        %1165 = vdwg.mxu0
        %s1166 = scalar_lea.vmem %s3, 928
        %v1167 = vld [vmem:[%s1166] sm:$0xff]
        %v1168 = vld [vmem:[%s1166 + $0x8] sm:$0xff]
        %v1169 = vld [vmem:[%s1166 + $0x10] sm:$0xff]
        %v1170 = vld [vmem:[%s1166 + $0x18] sm:$0xff]
        %v1171 = vld [vmem:[%s1166 + $0x20] sm:$0xff]
        %v1172 = vld [vmem:[%s1166 + $0x28] sm:$0xff]
        %v1173 = vld [vmem:[%s1166 + $0x30] sm:$0xff]
        %v1174 = vld [vmem:[%s1166 + $0x38] sm:$0xff]
        %v1175 = vld [vmem:[%s1166 + $0x40] sm:$0xff]
        %v1176 = vld [vmem:[%s1166 + $0x48] sm:$0xff]
        %v1177 = vld [vmem:[%s1166 + $0x50] sm:$0xff]
        %v1178 = vld [vmem:[%s1166 + $0x58] sm:$0xff]
        %v1179 = vld [vmem:[%s1166 + $0x60] sm:$0xff]
        %v1180 = vld [vmem:[%s1166 + $0x68] sm:$0xff]
        %v1181 = vld [vmem:[%s1166 + $0x70] sm:$0xff]
        %v1182 = vld [vmem:[%s1166 + $0x78] sm:$0xff]
        %v1183 = vld [vmem:[%s1166 + $0x80] sm:$0xff]
        %v1184 = vld [vmem:[%s1166 + $0x88] sm:$0xff]
        %v1185 = vld [vmem:[%s1166 + $0x90] sm:$0xff]
        %v1186 = vld [vmem:[%s1166 + $0x98] sm:$0xff]
        %v1187 = vld [vmem:[%s1166 + $0xa0] sm:$0xff]
        %v1188 = vld [vmem:[%s1166 + $0xa8] sm:$0xff]
        %v1189 = vld [vmem:[%s1166 + $0xb0] sm:$0xff]
        %v1190 = vld [vmem:[%s1166 + $0xb8] sm:$0xff]
        %v1191 = vld [vmem:[%s1166 + $0xc0] sm:$0xff]
        %v1192 = vld [vmem:[%s1166 + $0xc8] sm:$0xff]
        %v1193 = vld [vmem:[%s1166 + $0xd0] sm:$0xff]
        %v1194 = vld [vmem:[%s1166 + $0xd8] sm:$0xff]
        %v1195 = vld [vmem:[%s1166 + $0xe0] sm:$0xff]
        %v1196 = vld [vmem:[%s1166 + $0xe8] sm:$0xff]
        %v1197 = vld [vmem:[%s1166 + $0xf0] sm:$0xff]
        %v1198 = vld [vmem:[%s1166 + $0xf8] sm:$0xff]
        %v1199 = vld [vmem:[%s1166 + $0x100] sm:$0xff]
        %v1200 = vld [vmem:[%s1166 + $0x108] sm:$0xff]
        %v1201 = vld [vmem:[%s1166 + $0x110] sm:$0xff]
        %v1202 = vld [vmem:[%s1166 + $0x118] sm:$0xff]
        %v1203 = vld [vmem:[%s1166 + $0x120] sm:$0xff]
        %v1204 = vld [vmem:[%s1166 + $0x128] sm:$0xff]
        %v1205 = vld [vmem:[%s1166 + $0x130] sm:$0xff]
        %v1206 = vld [vmem:[%s1166 + $0x138] sm:$0xff]
        %v1207 = vld [vmem:[%s1166 + $0x140] sm:$0xff]
        %v1208 = vld [vmem:[%s1166 + $0x148] sm:$0xff]
        %v1209 = vld [vmem:[%s1166 + $0x150] sm:$0xff]
        %v1210 = vld [vmem:[%s1166 + $0x158] sm:$0xff]
        %v1211 = vld [vmem:[%s1166 + $0x160] sm:$0xff]
        %v1212 = vld [vmem:[%s1166 + $0x168] sm:$0xff]
        %v1213 = vld [vmem:[%s1166 + $0x170] sm:$0xff]
        %v1214 = vld [vmem:[%s1166 + $0x178] sm:$0xff]
        %v1215 = vld [vmem:[%s1166 + $0x180] sm:$0xff]
        %v1216 = vld [vmem:[%s1166 + $0x188] sm:$0xff]
        %v1217 = vld [vmem:[%s1166 + $0x190] sm:$0xff]
        %v1218 = vld [vmem:[%s1166 + $0x198] sm:$0xff]
        %v1219 = vld [vmem:[%s1166 + $0x1a0] sm:$0xff]
        %v1220 = vld [vmem:[%s1166 + $0x1a8] sm:$0xff]
        %v1221 = vld [vmem:[%s1166 + $0x1b0] sm:$0xff]
        %v1222 = vld [vmem:[%s1166 + $0x1b8] sm:$0xff]
        %v1223 = vld [vmem:[%s1166 + $0x1c0] sm:$0x3f]
        %v1224 = vld [vmem:[%s1166 + $0x1c8] sm:$0x3f]
        %v1225 = vrot.slane %v819, 4
        %v1226 = vrot.slane %v821, 4
        %v1227 = vsel %vm363, %v1225, %v1226
        %v1228 = vrot.slane %v820, 4
        %v1229 = vrot.slane %v822, 4
        %v1230 = vsel %vm363, %v1228, %v1229
        %v1231 = vrot.slane %v823, 4
        %v1232 = vsel %vm363, %v1226, %v1231
        %v1233 = vrot.slane %v824, 4
        %v1234 = vsel %vm363, %v1229, %v1233
        %v1237 = vsel %vm961, %v1230, 0
        %v1239 = vsel %vm961, %v1234, 0
        %v1242 = vsel %vm948, %v1223, 0
        %v1245 = vsel %vm948, %v1224, 0
        %1247 = vmatpush.msra.mxu0 %v1197
        %1248 = vmatpush.msra.mxu0 %v1195
        %1249 = vmatpush.msra.mxu0 %v1193
        %1250 = vmatpush.msra.mxu0 %v1191
        %1251 = vmatpush.msra.mxu0 %v1189
        %1252 = vmatpush.msra.mxu0 %v1187
        %1253 = vmatpush.msra.mxu0 %v1185
        %1254 = vmatpush.msra.mxu0 %v1183
        %1255 = vmatpush.msra.mxu0 %v1181
        %1256 = vmatpush.msra.mxu0 %v1179
        %1257 = vmatpush.msra.mxu0 %v1177
        %1258 = vmatpush.msra.mxu0 %v1175
        %1259 = vmatpush.msra.mxu0 %v1173
        %1260 = vmatpush.msra.mxu0 %v1171
        %1261 = vmatpush.msra.mxu0 %v1169
        %1262 = vmatpush.msra.mxu0 %v1167
        %1263 = vmatmul.f32.gmra.mxu0 %v1227
        %v1264 = vpop.f32.mrf.mxu0
        %v1265 = vadd.f32 0.0, %v1264
        %1266 = vmatmul.f32.gmra.mxu0 %v1232
        %v1267 = vpop.f32.mrf.mxu0
        %v1268 = vadd.f32 0.0, %v1267
        %1269 = vdwg.mxu0
        %1270 = vmatpush.msra.mxu0 0.0
        %1271 = vmatpush.msra.mxu0 0.0
        %1272 = vmatpush.msra.mxu0 0.0
        %1273 = vmatpush.msra.mxu0 %v1242
        %1274 = vmatpush.msra.mxu0 %v1221
        %1275 = vmatpush.msra.mxu0 %v1219
        %1276 = vmatpush.msra.mxu0 %v1217
        %1277 = vmatpush.msra.mxu0 %v1215
        %1278 = vmatpush.msra.mxu0 %v1213
        %1279 = vmatpush.msra.mxu0 %v1211
        %1280 = vmatpush.msra.mxu0 %v1209
        %1281 = vmatpush.msra.mxu0 %v1207
        %1282 = vmatpush.msra.mxu0 %v1205
        %1283 = vmatpush.msra.mxu0 %v1203
        %1284 = vmatpush.msra.mxu0 %v1201
        %1285 = vmatpush.msra.mxu0 %v1199
        %1286 = vmatmul.f32.gmra.mxu0 %v1237
        %v1287 = vpop.f32.mrf.mxu0
        %v1288 = vadd.f32 %v1265, %v1287
        %1289 = vmatmul.f32.gmra.mxu0 %v1239
        %v1290 = vpop.f32.mrf.mxu0
        %v1291 = vadd.f32 %v1268, %v1290
        %1292 = vdwg.mxu0
        %1293 = vmatpush.msra.mxu0 %v1198
        %1294 = vmatpush.msra.mxu0 %v1196
        %1295 = vmatpush.msra.mxu0 %v1194
        %1296 = vmatpush.msra.mxu0 %v1192
        %1297 = vmatpush.msra.mxu0 %v1190
        %1298 = vmatpush.msra.mxu0 %v1188
        %1299 = vmatpush.msra.mxu0 %v1186
        %1300 = vmatpush.msra.mxu0 %v1184
        %1301 = vmatpush.msra.mxu0 %v1182
        %1302 = vmatpush.msra.mxu0 %v1180
        %1303 = vmatpush.msra.mxu0 %v1178
        %1304 = vmatpush.msra.mxu0 %v1176
        %1305 = vmatpush.msra.mxu0 %v1174
        %1306 = vmatpush.msra.mxu0 %v1172
        %1307 = vmatpush.msra.mxu0 %v1170
        %1308 = vmatpush.msra.mxu0 %v1168
        %1309 = vmatmul.f32.gmra.mxu0 %v1227
        %v1310 = vpop.f32.mrf.mxu0
        %v1311 = vadd.f32 0.0, %v1310
        %1312 = vmatmul.f32.gmra.mxu0 %v1232
        %v1313 = vpop.f32.mrf.mxu0
        %v1314 = vadd.f32 0.0, %v1313
        %1315 = vdwg.mxu0
        %1316 = vmatpush.msra.mxu0 0.0
        %1317 = vmatpush.msra.mxu0 0.0
        %1318 = vmatpush.msra.mxu0 0.0
        %1319 = vmatpush.msra.mxu0 %v1245
        %1320 = vmatpush.msra.mxu0 %v1222
        %1321 = vmatpush.msra.mxu0 %v1220
        %1322 = vmatpush.msra.mxu0 %v1218
        %1323 = vmatpush.msra.mxu0 %v1216
        %1324 = vmatpush.msra.mxu0 %v1214
        %1325 = vmatpush.msra.mxu0 %v1212
        %1326 = vmatpush.msra.mxu0 %v1210
        %1327 = vmatpush.msra.mxu0 %v1208
        %1328 = vmatpush.msra.mxu0 %v1206
        %1329 = vmatpush.msra.mxu0 %v1204
        %1330 = vmatpush.msra.mxu0 %v1202
        %1331 = vmatpush.msra.mxu0 %v1200
        %1332 = vmatmul.f32.gmra.mxu0 %v1237
        %v1333 = vpop.f32.mrf.mxu0
        %v1334 = vadd.f32 %v1311, %v1333
        %1335 = vmatmul.f32.gmra.mxu0 %v1239
        %v1336 = vpop.f32.mrf.mxu0
        %v1337 = vadd.f32 %v1314, %v1336
        %1338 = vdwg.mxu0
        %v1339 = vadd.f32 %v1115, %v1288
        %v1340 = vadd.f32 %v1161, %v1334
        %v1341 = vadd.f32 %v1118, %v1291
        %v1342 = vadd.f32 %v1164, %v1337
        %s1343 = scalar_lea.vmem %s3, 1392
        %v1344 = vld [vmem:[%s1343] sm:$0xff]
        %v1345 = vld [vmem:[%s1343 + $0x8] sm:$0xff]
        %v1346 = vld [vmem:[%s1343 + $0x10] sm:$0xff]
        %v1347 = vld [vmem:[%s1343 + $0x18] sm:$0xff]
        %v1348 = vld [vmem:[%s1343 + $0x20] sm:$0xff]
        %v1349 = vld [vmem:[%s1343 + $0x28] sm:$0xff]
        %v1350 = vld [vmem:[%s1343 + $0x30] sm:$0xff]
        %v1351 = vld [vmem:[%s1343 + $0x38] sm:$0xff]
        %v1352 = vld [vmem:[%s1343 + $0x40] sm:$0xff]
        %v1353 = vld [vmem:[%s1343 + $0x48] sm:$0xff]
        %v1354 = vld [vmem:[%s1343 + $0x50] sm:$0xff]
        %v1355 = vld [vmem:[%s1343 + $0x58] sm:$0xff]
        %v1356 = vld [vmem:[%s1343 + $0x60] sm:$0xff]
        %v1357 = vld [vmem:[%s1343 + $0x68] sm:$0xff]
        %v1358 = vld [vmem:[%s1343 + $0x70] sm:$0xff]
        %v1359 = vld [vmem:[%s1343 + $0x78] sm:$0xff]
        %v1360 = vld [vmem:[%s1343 + $0x80] sm:$0xff]
        %v1361 = vld [vmem:[%s1343 + $0x88] sm:$0xff]
        %v1362 = vld [vmem:[%s1343 + $0x90] sm:$0xff]
        %v1363 = vld [vmem:[%s1343 + $0x98] sm:$0xff]
        %v1364 = vld [vmem:[%s1343 + $0xa0] sm:$0xff]
        %v1365 = vld [vmem:[%s1343 + $0xa8] sm:$0xff]
        %v1366 = vld [vmem:[%s1343 + $0xb0] sm:$0xff]
        %v1367 = vld [vmem:[%s1343 + $0xb8] sm:$0xff]
        %v1368 = vld [vmem:[%s1343 + $0xc0] sm:$0xff]
        %v1369 = vld [vmem:[%s1343 + $0xc8] sm:$0xff]
        %v1370 = vld [vmem:[%s1343 + $0xd0] sm:$0xff]
        %v1371 = vld [vmem:[%s1343 + $0xd8] sm:$0xff]
        %v1372 = vld [vmem:[%s1343 + $0xe0] sm:$0xff]
        %v1373 = vld [vmem:[%s1343 + $0xe8] sm:$0xff]
        %v1374 = vld [vmem:[%s1343 + $0xf0] sm:$0xff]
        %v1375 = vld [vmem:[%s1343 + $0xf8] sm:$0xff]
        %v1376 = vld [vmem:[%s1343 + $0x100] sm:$0xff]
        %v1377 = vld [vmem:[%s1343 + $0x108] sm:$0xff]
        %v1378 = vld [vmem:[%s1343 + $0x110] sm:$0xff]
        %v1379 = vld [vmem:[%s1343 + $0x118] sm:$0xff]
        %v1380 = vld [vmem:[%s1343 + $0x120] sm:$0xff]
        %v1381 = vld [vmem:[%s1343 + $0x128] sm:$0xff]
        %v1382 = vld [vmem:[%s1343 + $0x130] sm:$0xff]
        %v1383 = vld [vmem:[%s1343 + $0x138] sm:$0xff]
        %v1384 = vld [vmem:[%s1343 + $0x140] sm:$0xff]
        %v1385 = vld [vmem:[%s1343 + $0x148] sm:$0xff]
        %v1386 = vld [vmem:[%s1343 + $0x150] sm:$0xff]
        %v1387 = vld [vmem:[%s1343 + $0x158] sm:$0xff]
        %v1388 = vld [vmem:[%s1343 + $0x160] sm:$0xff]
        %v1389 = vld [vmem:[%s1343 + $0x168] sm:$0xff]
        %v1390 = vld [vmem:[%s1343 + $0x170] sm:$0xff]
        %v1391 = vld [vmem:[%s1343 + $0x178] sm:$0xff]
        %v1392 = vld [vmem:[%s1343 + $0x180] sm:$0xff]
        %v1393 = vld [vmem:[%s1343 + $0x188] sm:$0xff]
        %v1394 = vld [vmem:[%s1343 + $0x190] sm:$0xff]
        %v1395 = vld [vmem:[%s1343 + $0x198] sm:$0xff]
        %v1396 = vld [vmem:[%s1343 + $0x1a0] sm:$0xff]
        %v1397 = vld [vmem:[%s1343 + $0x1a8] sm:$0xff]
        %v1398 = vld [vmem:[%s1343 + $0x1b0] sm:$0xff]
        %v1399 = vld [vmem:[%s1343 + $0x1b8] sm:$0xff]
        %v1400 = vld [vmem:[%s1343 + $0x1c0] sm:$0x3f]
        %v1401 = vld [vmem:[%s1343 + $0x1c8] sm:$0x3f]
        %vm1402 = vcmask 1041408
        %v1403 = vrot.slane %v819, 6
        %v1404 = vrot.slane %v821, 6
        %v1405 = vsel %vm1402, %v1403, %v1404
        %v1406 = vrot.slane %v820, 6
        %v1407 = vrot.slane %v822, 6
        %v1408 = vsel %vm1402, %v1406, %v1407
        %v1409 = vrot.slane %v823, 6
        %v1410 = vsel %vm1402, %v1404, %v1409
        %v1411 = vrot.slane %v824, 6
        %v1412 = vsel %vm1402, %v1407, %v1411
        %v1415 = vsel %vm961, %v1408, 0
        %v1417 = vsel %vm961, %v1412, 0
        %v1420 = vsel %vm948, %v1400, 0
        %v1423 = vsel %vm948, %v1401, 0
        %1425 = vmatpush.msra.mxu0 %v1374
        %1426 = vmatpush.msra.mxu0 %v1372
        %1427 = vmatpush.msra.mxu0 %v1370
        %1428 = vmatpush.msra.mxu0 %v1368
        %1429 = vmatpush.msra.mxu0 %v1366
        %1430 = vmatpush.msra.mxu0 %v1364
        %1431 = vmatpush.msra.mxu0 %v1362
        %1432 = vmatpush.msra.mxu0 %v1360
        %1433 = vmatpush.msra.mxu0 %v1358
        %1434 = vmatpush.msra.mxu0 %v1356
        %1435 = vmatpush.msra.mxu0 %v1354
        %1436 = vmatpush.msra.mxu0 %v1352
        %1437 = vmatpush.msra.mxu0 %v1350
        %1438 = vmatpush.msra.mxu0 %v1348
        %1439 = vmatpush.msra.mxu0 %v1346
        %1440 = vmatpush.msra.mxu0 %v1344
        %1441 = vmatmul.f32.gmra.mxu0 %v1405
        %v1442 = vpop.f32.mrf.mxu0
        %v1443 = vadd.f32 0.0, %v1442
        %1444 = vmatmul.f32.gmra.mxu0 %v1410
        %v1445 = vpop.f32.mrf.mxu0
        %v1446 = vadd.f32 0.0, %v1445
        %1447 = vdwg.mxu0
        %1448 = vmatpush.msra.mxu0 0.0
        %1449 = vmatpush.msra.mxu0 0.0
        %1450 = vmatpush.msra.mxu0 0.0
        %1451 = vmatpush.msra.mxu0 %v1420
        %1452 = vmatpush.msra.mxu0 %v1398
        %1453 = vmatpush.msra.mxu0 %v1396
        %1454 = vmatpush.msra.mxu0 %v1394
        %1455 = vmatpush.msra.mxu0 %v1392
        %1456 = vmatpush.msra.mxu0 %v1390
        %1457 = vmatpush.msra.mxu0 %v1388
        %1458 = vmatpush.msra.mxu0 %v1386
        %1459 = vmatpush.msra.mxu0 %v1384
        %1460 = vmatpush.msra.mxu0 %v1382
        %1461 = vmatpush.msra.mxu0 %v1380
        %1462 = vmatpush.msra.mxu0 %v1378
        %1463 = vmatpush.msra.mxu0 %v1376
        %1464 = vmatmul.f32.gmra.mxu0 %v1415
        %v1465 = vpop.f32.mrf.mxu0
        %v1466 = vadd.f32 %v1443, %v1465
        %1467 = vmatmul.f32.gmra.mxu0 %v1417
        %v1468 = vpop.f32.mrf.mxu0
        %v1469 = vadd.f32 %v1446, %v1468
        %1470 = vdwg.mxu0
        %1471 = vmatpush.msra.mxu0 %v1375
        %1472 = vmatpush.msra.mxu0 %v1373
        %1473 = vmatpush.msra.mxu0 %v1371
        %1474 = vmatpush.msra.mxu0 %v1369
        %1475 = vmatpush.msra.mxu0 %v1367
        %1476 = vmatpush.msra.mxu0 %v1365
        %1477 = vmatpush.msra.mxu0 %v1363
        %1478 = vmatpush.msra.mxu0 %v1361
        %1479 = vmatpush.msra.mxu0 %v1359
        %1480 = vmatpush.msra.mxu0 %v1357
        %1481 = vmatpush.msra.mxu0 %v1355
        %1482 = vmatpush.msra.mxu0 %v1353
        %1483 = vmatpush.msra.mxu0 %v1351
        %1484 = vmatpush.msra.mxu0 %v1349
        %1485 = vmatpush.msra.mxu0 %v1347
        %1486 = vmatpush.msra.mxu0 %v1345
        %1487 = vmatmul.f32.gmra.mxu0 %v1405
        %v1488 = vpop.f32.mrf.mxu0
        %v1489 = vadd.f32 0.0, %v1488
        %1490 = vmatmul.f32.gmra.mxu0 %v1410
        %v1491 = vpop.f32.mrf.mxu0
        %v1492 = vadd.f32 0.0, %v1491
        %1493 = vdwg.mxu0
        %1494 = vmatpush.msra.mxu0 0.0
        %1495 = vmatpush.msra.mxu0 0.0
        %1496 = vmatpush.msra.mxu0 0.0
        %1497 = vmatpush.msra.mxu0 %v1423
        %1498 = vmatpush.msra.mxu0 %v1399
        %1499 = vmatpush.msra.mxu0 %v1397
        %1500 = vmatpush.msra.mxu0 %v1395
        %1501 = vmatpush.msra.mxu0 %v1393
        %1502 = vmatpush.msra.mxu0 %v1391
        %1503 = vmatpush.msra.mxu0 %v1389
        %1504 = vmatpush.msra.mxu0 %v1387
        %1505 = vmatpush.msra.mxu0 %v1385
        %1506 = vmatpush.msra.mxu0 %v1383
        %1507 = vmatpush.msra.mxu0 %v1381
        %1508 = vmatpush.msra.mxu0 %v1379
        %1509 = vmatpush.msra.mxu0 %v1377
        %1510 = vmatmul.f32.gmra.mxu0 %v1415
        %v1511 = vpop.f32.mrf.mxu0
        %v1512 = vadd.f32 %v1489, %v1511
        %1513 = vmatmul.f32.gmra.mxu0 %v1417
        %v1514 = vpop.f32.mrf.mxu0
        %v1515 = vadd.f32 %v1492, %v1514
        %1516 = vdwg.mxu0
        %v1517 = vadd.f32 %v1339, %v1466
        %v1518 = vadd.f32 %v1340, %v1512
        %v1519 = vadd.f32 %v1341, %v1469
        %v1520 = vadd.f32 %v1342, %v1515
        %s1521 = scalar_lea.vmem %s3, 1856
        %v1522 = vld [vmem:[%s1521] sm:$0xff]
        %v1523 = vld [vmem:[%s1521 + $0x8] sm:$0xff]
        %v1524 = vld [vmem:[%s1521 + $0x10] sm:$0xff]
        %v1525 = vld [vmem:[%s1521 + $0x18] sm:$0xff]
        %v1526 = vld [vmem:[%s1521 + $0x20] sm:$0xff]
        %v1527 = vld [vmem:[%s1521 + $0x28] sm:$0xff]
        %v1528 = vld [vmem:[%s1521 + $0x30] sm:$0xff]
        %v1529 = vld [vmem:[%s1521 + $0x38] sm:$0xff]
        %v1530 = vld [vmem:[%s1521 + $0x40] sm:$0xff]
        %v1531 = vld [vmem:[%s1521 + $0x48] sm:$0xff]
        %v1532 = vld [vmem:[%s1521 + $0x50] sm:$0xff]
        %v1533 = vld [vmem:[%s1521 + $0x58] sm:$0xff]
        %v1534 = vld [vmem:[%s1521 + $0x60] sm:$0xff]
        %v1535 = vld [vmem:[%s1521 + $0x68] sm:$0xff]
        %v1536 = vld [vmem:[%s1521 + $0x70] sm:$0xff]
        %v1537 = vld [vmem:[%s1521 + $0x78] sm:$0xff]
        %v1538 = vld [vmem:[%s1521 + $0x80] sm:$0xff]
        %v1539 = vld [vmem:[%s1521 + $0x88] sm:$0xff]
        %v1540 = vld [vmem:[%s1521 + $0x90] sm:$0xff]
        %v1541 = vld [vmem:[%s1521 + $0x98] sm:$0xff]
        %v1542 = vld [vmem:[%s1521 + $0xa0] sm:$0xff]
        %v1543 = vld [vmem:[%s1521 + $0xa8] sm:$0xff]
        %v1544 = vld [vmem:[%s1521 + $0xb0] sm:$0xff]
        %v1545 = vld [vmem:[%s1521 + $0xb8] sm:$0xff]
        %v1546 = vld [vmem:[%s1521 + $0xc0] sm:$0xff]
        %v1547 = vld [vmem:[%s1521 + $0xc8] sm:$0xff]
        %v1548 = vld [vmem:[%s1521 + $0xd0] sm:$0xff]
        %v1549 = vld [vmem:[%s1521 + $0xd8] sm:$0xff]
        %v1550 = vld [vmem:[%s1521 + $0xe0] sm:$0xff]
        %v1551 = vld [vmem:[%s1521 + $0xe8] sm:$0xff]
        %v1552 = vld [vmem:[%s1521 + $0xf0] sm:$0xff]
        %v1553 = vld [vmem:[%s1521 + $0xf8] sm:$0xff]
        %v1554 = vld [vmem:[%s1521 + $0x100] sm:$0xff]
        %v1555 = vld [vmem:[%s1521 + $0x108] sm:$0xff]
        %v1556 = vld [vmem:[%s1521 + $0x110] sm:$0xff]
        %v1557 = vld [vmem:[%s1521 + $0x118] sm:$0xff]
        %v1558 = vld [vmem:[%s1521 + $0x120] sm:$0xff]
        %v1559 = vld [vmem:[%s1521 + $0x128] sm:$0xff]
        %v1560 = vld [vmem:[%s1521 + $0x130] sm:$0xff]
        %v1561 = vld [vmem:[%s1521 + $0x138] sm:$0xff]
        %v1562 = vld [vmem:[%s1521 + $0x140] sm:$0xff]
        %v1563 = vld [vmem:[%s1521 + $0x148] sm:$0xff]
        %v1564 = vld [vmem:[%s1521 + $0x150] sm:$0xff]
        %v1565 = vld [vmem:[%s1521 + $0x158] sm:$0xff]
        %v1566 = vld [vmem:[%s1521 + $0x160] sm:$0xff]
        %v1567 = vld [vmem:[%s1521 + $0x168] sm:$0xff]
        %v1568 = vld [vmem:[%s1521 + $0x170] sm:$0xff]
        %v1569 = vld [vmem:[%s1521 + $0x178] sm:$0xff]
        %v1570 = vld [vmem:[%s1521 + $0x180] sm:$0xff]
        %v1571 = vld [vmem:[%s1521 + $0x188] sm:$0xff]
        %v1572 = vld [vmem:[%s1521 + $0x190] sm:$0xff]
        %v1573 = vld [vmem:[%s1521 + $0x198] sm:$0xff]
        %v1574 = vld [vmem:[%s1521 + $0x1a0] sm:$0xff]
        %v1575 = vld [vmem:[%s1521 + $0x1a8] sm:$0xff]
        %v1576 = vld [vmem:[%s1521 + $0x1b0] sm:$0xff]
        %v1577 = vld [vmem:[%s1521 + $0x1b8] sm:$0xff]
        %v1578 = vld [vmem:[%s1521 + $0x1c0] sm:$0x3f]
        %v1579 = vld [vmem:[%s1521 + $0x1c8] sm:$0x3f]
        %v1580 = vsel %vm961, %v824, 0
        %v1583 = vsel %vm948, %v1578, 0
        %v1586 = vsel %vm948, %v1579, 0
        %1588 = vmatpush.msra.mxu0 %v1552
        %1589 = vmatpush.msra.mxu0 %v1550
        %1590 = vmatpush.msra.mxu0 %v1548
        %1591 = vmatpush.msra.mxu0 %v1546
        %1592 = vmatpush.msra.mxu0 %v1544
        %1593 = vmatpush.msra.mxu0 %v1542
        %1594 = vmatpush.msra.mxu0 %v1540
        %1595 = vmatpush.msra.mxu0 %v1538
        %1596 = vmatpush.msra.mxu0 %v1536
        %1597 = vmatpush.msra.mxu0 %v1534
        %1598 = vmatpush.msra.mxu0 %v1532
        %1599 = vmatpush.msra.mxu0 %v1530
        %1600 = vmatpush.msra.mxu0 %v1528
        %1601 = vmatpush.msra.mxu0 %v1526
        %1602 = vmatpush.msra.mxu0 %v1524
        %1603 = vmatpush.msra.mxu0 %v1522
        %1604 = vmatmul.f32.gmra.mxu0 %v821
        %v1605 = vpop.f32.mrf.mxu0
        %v1606 = vadd.f32 0.0, %v1605
        %1607 = vmatmul.f32.gmra.mxu0 %v823
        %v1608 = vpop.f32.mrf.mxu0
        %v1609 = vadd.f32 0.0, %v1608
        %1610 = vdwg.mxu0
        %1611 = vmatpush.msra.mxu0 0.0
        %1612 = vmatpush.msra.mxu0 0.0
        %1613 = vmatpush.msra.mxu0 0.0
        %1614 = vmatpush.msra.mxu0 %v1583
        %1615 = vmatpush.msra.mxu0 %v1576
        %1616 = vmatpush.msra.mxu0 %v1574
        %1617 = vmatpush.msra.mxu0 %v1572
        %1618 = vmatpush.msra.mxu0 %v1570
        %1619 = vmatpush.msra.mxu0 %v1568
        %1620 = vmatpush.msra.mxu0 %v1566
        %1621 = vmatpush.msra.mxu0 %v1564
        %1622 = vmatpush.msra.mxu0 %v1562
        %1623 = vmatpush.msra.mxu0 %v1560
        %1624 = vmatpush.msra.mxu0 %v1558
        %1625 = vmatpush.msra.mxu0 %v1556
        %1626 = vmatpush.msra.mxu0 %v1554
        %1627 = vmatmul.f32.gmra.mxu0 %v1066
        %v1628 = vpop.f32.mrf.mxu0
        %v1629 = vadd.f32 %v1606, %v1628
        %1630 = vmatmul.f32.gmra.mxu0 %v1580
        %v1631 = vpop.f32.mrf.mxu0
        %v1632 = vadd.f32 %v1609, %v1631
        %1633 = vdwg.mxu0
        %1634 = vmatpush.msra.mxu0 %v1553
        %1635 = vmatpush.msra.mxu0 %v1551
        %1636 = vmatpush.msra.mxu0 %v1549
        %1637 = vmatpush.msra.mxu0 %v1547
        %1638 = vmatpush.msra.mxu0 %v1545
        %1639 = vmatpush.msra.mxu0 %v1543
        %1640 = vmatpush.msra.mxu0 %v1541
        %1641 = vmatpush.msra.mxu0 %v1539
        %1642 = vmatpush.msra.mxu0 %v1537
        %1643 = vmatpush.msra.mxu0 %v1535
        %1644 = vmatpush.msra.mxu0 %v1533
        %1645 = vmatpush.msra.mxu0 %v1531
        %1646 = vmatpush.msra.mxu0 %v1529
        %1647 = vmatpush.msra.mxu0 %v1527
        %1648 = vmatpush.msra.mxu0 %v1525
        %1649 = vmatpush.msra.mxu0 %v1523
        %1650 = vmatmul.f32.gmra.mxu0 %v821
        %v1651 = vpop.f32.mrf.mxu0
        %v1652 = vadd.f32 0.0, %v1651
        %1653 = vmatmul.f32.gmra.mxu0 %v823
        %v1654 = vpop.f32.mrf.mxu0
        %v1655 = vadd.f32 0.0, %v1654
        %1656 = vdwg.mxu0
        %1657 = vmatpush.msra.mxu0 0.0
        %1658 = vmatpush.msra.mxu0 0.0
        %1659 = vmatpush.msra.mxu0 0.0
        %1660 = vmatpush.msra.mxu0 %v1586
        %1661 = vmatpush.msra.mxu0 %v1577
        %1662 = vmatpush.msra.mxu0 %v1575
        %1663 = vmatpush.msra.mxu0 %v1573
        %1664 = vmatpush.msra.mxu0 %v1571
        %1665 = vmatpush.msra.mxu0 %v1569
        %1666 = vmatpush.msra.mxu0 %v1567
        %1667 = vmatpush.msra.mxu0 %v1565
        %1668 = vmatpush.msra.mxu0 %v1563
        %1669 = vmatpush.msra.mxu0 %v1561
        %1670 = vmatpush.msra.mxu0 %v1559
        %1671 = vmatpush.msra.mxu0 %v1557
        %1672 = vmatpush.msra.mxu0 %v1555
        %1673 = vmatmul.f32.gmra.mxu0 %v1066
        %v1674 = vpop.f32.mrf.mxu0
        %v1675 = vadd.f32 %v1652, %v1674
        %1676 = vmatmul.f32.gmra.mxu0 %v1580
        %v1677 = vpop.f32.mrf.mxu0
        %v1678 = vadd.f32 %v1655, %v1677
        %1679 = vdwg.mxu0
        %v1680 = vadd.f32 %v1517, %v1629
        %v1681 = vadd.f32 %v1518, %v1675
        %v1682 = vadd.f32 %v1519, %v1632
        %v1683 = vadd.f32 %v1520, %v1678
        %v1684 = vld [vmem:[%s4] sm:$0x3]
        %v1686 = vperm.slane %v1684, 0
        %v1687 = vperm.slane %v1684, 1
        %v1690 = vadd.f32 %v1680, %v1686
        %v1691 = vadd.f32 %v1681, %v1687
        %v1692 = vadd.f32 %v1682, %v1686
        %v1693 = vadd.f32 %v1683, %v1687
        %v1694 = vmax.f32 %v1690, 0.0
        %v1695 = vmax.f32 %v1691, 0.0
        %v1696 = vmax.f32 %v1692, 0.0
        %v1697 = vmax.f32 %v1693, 0.0
        %v1702 = vrot.slane %v1694, 2
        %v1703 = vrot.slane %v1696, 2
        %v1704 = vsel %vm948, %v1702, %v1703
        %v1705 = vrot.slane %v1695, 2
        %v1706 = vrot.slane %v1697, 2
        %v1707 = vsel %vm948, %v1705, %v1706
        %v1712 = vmax.f32 %v1694, %v1704
        %v1713 = vmax.f32 %v1695, %v1707
        %v1714 = vmax.f32 %v1696, %v1703
        %v1715 = vmax.f32 %v1697, %v1706
        %1720 = vrot.lane.b32.xlu0 %v1712, 108
        %v1721 = vpop.permute.xlu0 %1720
        %1722 = vrot.lane.b32.xlu0 %v1713, 108
        %v1723 = vpop.permute.xlu0 %1722
        %1724 = vrot.lane.b32.xlu0 %v1714, 108
        %v1725 = vpop.permute.xlu0 %1724
        %1726 = vrot.lane.b32.xlu0 %v1715, 108
        %v1727 = vpop.permute.xlu0 %1726
        %vm1728 = vcmask 883712
        %v1729 = vsel %vm1728, %v1721, %v1723
        %v1730 = vsel %vm1728, %v1725, %v1727
        %v1735 = vmax.f32 %v1712, %v1729
        %v1736 = vmax.f32 %v1713, %v1723
        %v1737 = vmax.f32 %v1714, %v1730
        %v1738 = vmax.f32 %v1715, %v1727
        %v1739 = vlaneseq
        %vm1740 = vcmp.ge.s32.totalorder %v1739, 0
        %vm1741 = vcmp.lt.s32.totalorder %v1739, 20
        %vm1742 = vmand %vm1740, %vm1741
        %1743 = vst.msk [vmem:[#allocation2] sm:$0x1] %vm1742, %v1735
        %1745 = vrot.lane.b32.xlu0 %v1735, 108
        %v1746 = vpop.permute.xlu0 %1745
        %vm1748 = vcmp.ge.s32.totalorder %v1739, 20
        %vm1749 = vcmp.lt.s32.totalorder %v1739, 40
        %vm1750 = vmand %vm1748, %vm1749
        %1751 = vst.msk [vmem:[#allocation2] sm:$0x1] %vm1750, %v1746
        %1752 = vrot.lane.b32.xlu0 %v1735, 88
        %v1753 = vpop.permute.xlu0 %1752
        %vm1755 = vcmp.ge.s32.totalorder %v1739, 40
        %vm1756 = vcmp.lt.s32.totalorder %v1739, 60
        %vm1757 = vmand %vm1755, %vm1756
        %1758 = vst.msk [vmem:[#allocation2] sm:$0x1] %vm1757, %v1753
        %v1760 = vrot.slane %v1736, 7
        %vm1761 = vcmask 1040384
        %v1762 = vsel %vm1761, %v1735, %v1760
        %1763 = vrot.lane.b32.xlu0 %v1762, 68
        %v1764 = vpop.permute.xlu0 %1763
        %v1765 = vrot.slane %v1764, 1
        %vm1766 = vcmask 556032
        %v1767 = vsel %vm1766, %v1764, %v1765
        %vm1769 = vcmp.ge.s32.totalorder %v1739, 60
        %vm1770 = vcmp.lt.s32.totalorder %v1739, 80
        %vm1771 = vmand %vm1769, %vm1770
        %1772 = vst.msk [vmem:[#allocation2] sm:$0x1] %vm1771, %v1767
        %1773 = vst [vmem:[#allocation1] sm:$0xff] %v1735
        %s1774 = scalar_lea.vmem [#allocation1], 4
        %v1775 = vld [vmem:[%s1774] ss:$9 sm:$0xff]
        %1776 = vrot.lane.b32.xlu0 %v1775, 80
        %v1777 = vpop.permute.xlu0 %1776
        %vm1779 = vcmp.ge.s32.totalorder %v1739, 80
        %vm1780 = vcmp.lt.s32.totalorder %v1739, 100
        %vm1781 = vmand %vm1779, %vm1780
        %1782 = vst.msk [vmem:[#allocation2] sm:$0x1] %vm1781, %v1777
        %1783 = vst [vmem:[#allocation1] sm:$0xff] %v1735
        %s1784 = scalar_lea.vmem [#allocation1], 4
        %v1785 = vld [vmem:[%s1784] ss:$9 sm:$0xff]
        %1786 = vrot.lane.b32.xlu0 %v1785, 60
        %v1787 = vpop.permute.xlu0 %1786
        %vm1789 = vcmp.ge.s32.totalorder %v1739, 100
        %vm1790 = vcmp.lt.s32.totalorder %v1739, 120
        %vm1791 = vmand %vm1789, %vm1790
        %1792 = vst.msk [vmem:[#allocation2] sm:$0x1] %vm1791, %v1787
        %1793 = vst [vmem:[#allocation1] sm:$0xff] %v1735
        %s1794 = scalar_lea.vmem [#allocation1], 4
        %v1795 = vld [vmem:[%s1794] ss:$9 sm:$0xff]
        %1796 = vrot.lane.b32.xlu0 %v1795, 40
        %v1797 = vpop.permute.xlu0 %1796
        %v1798 = vrot.slane %v1797, 7
        %vm1799 = vcmask 326656
        %v1800 = vsel %vm1799, %v1798, %v1797
        %vm1802 = vcmp.ge.s32.totalorder %v1739, 120
        %vm1803 = vcmp.lt.s32.totalorder %v1739, 140
        %vm1804 = vmand %vm1802, %vm1803
        %1805 = vst.msk [vmem:[#allocation2] sm:$0x3] %vm1804, %v1800
        %1806 = vst [vmem:[#allocation1] sm:$0xff] %v1735
        %1807 = vst [vmem:[#allocation1 + $0x9] sm:$0xff] %v1736
        %s1808 = scalar_lea.vmem [#allocation1], 4
        %v1809 = vld [vmem:[%s1808] ss:$9 sm:$0xff]
        %1810 = vrot.lane.b32.xlu0 %v1809, 20
        %v1811 = vpop.permute.xlu0 %1810
        %v1812 = vrot.slane %v1811, 1
        %vm1813 = vcmask 162816
        %v1814 = vsel %vm1813, %v1811, %v1812
        %vm1816 = vcmp.ge.s32.totalorder %v1739, 12
        %vm1817 = vcmp.lt.s32.totalorder %v1739, 32
        %vm1818 = vmand %vm1816, %vm1817
        %1819 = vst.msk [vmem:[#allocation2 + $0x1] sm:$0x1] %vm1818, %v1814
        %1821 = vrot.lane.b32.xlu0 %v1737, 32
        %v1822 = vpop.permute.xlu0 %1821
        %vm1824 = vcmp.ge.s32.totalorder %v1739, 32
        %vm1825 = vcmp.lt.s32.totalorder %v1739, 52
        %vm1826 = vmand %vm1824, %vm1825
        %1827 = vst.msk [vmem:[#allocation2 + $0x1] sm:$0x1] %vm1826, %v1822
        %1828 = vrot.lane.b32.xlu0 %v1737, 12
        %v1829 = vpop.permute.xlu0 %1828
        %vm1831 = vcmp.ge.s32.totalorder %v1739, 52
        %vm1832 = vcmp.lt.s32.totalorder %v1739, 72
        %vm1833 = vmand %vm1831, %vm1832
        %1834 = vst.msk [vmem:[#allocation2 + $0x1] sm:$0x1] %vm1833, %v1829
        %1835 = vrot.lane.b32.xlu0 %v1737, 120
        %v1836 = vpop.permute.xlu0 %1835
        %vm1838 = vcmp.ge.s32.totalorder %v1739, 72
        %vm1839 = vcmp.lt.s32.totalorder %v1739, 92
        %vm1840 = vmand %vm1838, %vm1839
        %1841 = vst.msk [vmem:[#allocation2 + $0x1] sm:$0x1] %vm1840, %v1836
        %v1843 = vrot.slane %v1738, 7
        %v1844 = vsel %vm1761, %v1737, %v1843
        %1845 = vrot.lane.b32.xlu0 %v1844, 100
        %v1846 = vpop.permute.xlu0 %1845
        %v1847 = vrot.slane %v1846, 1
        %vm1848 = vcmask 818176
        %v1849 = vsel %vm1848, %v1846, %v1847
        %vm1851 = vcmp.ge.s32.totalorder %v1739, 92
        %vm1852 = vcmp.lt.s32.totalorder %v1739, 112
        %vm1853 = vmand %vm1851, %vm1852
        %1854 = vst.msk [vmem:[#allocation2 + $0x1] sm:$0x1] %vm1853, %v1849
        %1855 = vst [vmem:[#allocation1] sm:$0xff] %v1737
        %s1856 = scalar_lea.vmem [#allocation1], 4
        %v1857 = vld [vmem:[%s1856] ss:$9 sm:$0xff]
        %1858 = vrot.lane.b32.xlu0 %v1857, 112
        %v1859 = vpop.permute.xlu0 %1858
        %v1860 = vrot.slane %v1859, 7
        %vm1861 = vcmask 916480
        %v1862 = vsel %vm1861, %v1860, %v1859
        %vm1864 = vcmp.ge.s32.totalorder %v1739, 112
        %vm1865 = vcmp.lt.s32.totalorder %v1739, 132
        %vm1866 = vmand %vm1864, %vm1865
        %1867 = vst.msk [vmem:[#allocation2 + $0x1] sm:$0x3] %vm1866, %v1862
        %1868 = vst [vmem:[#allocation1] sm:$0xff] %v1737
        %s1869 = scalar_lea.vmem [#allocation1], 4
        %v1870 = vld [vmem:[%s1869] ss:$9 sm:$0xff]
        %1871 = vrot.lane.b32.xlu0 %v1870, 92
        %v1872 = vpop.permute.xlu0 %1871
        %vm1874 = vcmp.ge.s32.totalorder %v1739, 4
        %vm1875 = vcmp.lt.s32.totalorder %v1739, 24
        %vm1876 = vmand %vm1874, %vm1875
        %1877 = vst.msk [vmem:[#allocation2 + $0x2] sm:$0x1] %vm1876, %v1872
        %1878 = vst [vmem:[#allocation1] sm:$0xff] %v1737
        %s1879 = scalar_lea.vmem [#allocation1], 4
        %v1880 = vld [vmem:[%s1879] ss:$9 sm:$0xff]
        %1881 = vrot.lane.b32.xlu0 %v1880, 72
        %v1882 = vpop.permute.xlu0 %1881
        %vm1884 = vcmp.ge.s32.totalorder %v1739, 24
        %vm1885 = vcmp.lt.s32.totalorder %v1739, 44
        %vm1886 = vmand %vm1884, %vm1885
        %1887 = vst.msk [vmem:[#allocation2 + $0x2] sm:$0x1] %vm1886, %v1882
        %1888 = vst [vmem:[#allocation1] sm:$0xff] %v1737
        %1889 = vst [vmem:[#allocation1 + $0x9] sm:$0xff] %v1738
        %s1890 = scalar_lea.vmem [#allocation1], 4
        %v1891 = vld [vmem:[%s1890] ss:$9 sm:$0xff]
        %1892 = vrot.lane.b32.xlu0 %v1891, 52
        %v1893 = vpop.permute.xlu0 %1892
        %v1894 = vrot.slane %v1893, 1
        %vm1895 = vcmask 424960
        %v1896 = vsel %vm1895, %v1893, %v1894
        %vm1898 = vcmp.ge.s32.totalorder %v1739, 44
        %vm1899 = vcmp.lt.s32.totalorder %v1739, 64
        %vm1900 = vmand %vm1898, %vm1899
        %1901 = vst.msk [vmem:[#allocation2 + $0x2] sm:$0x1] %vm1900, %v1896
        %v1902 = vld [vmem:[#allocation2] sm:$0x7]
        %v1903 = vld [vmem:[%s5] sm:$0xff]
        %v1904 = vld [vmem:[%s5 + $0x8] sm:$0xff]
        %v1905 = vld [vmem:[%s5 + $0x10] sm:$0xff]
        %v1906 = vld [vmem:[%s5 + $0x18] sm:$0xff]
        %v1907 = vld [vmem:[%s5 + $0x20] sm:$0xff]
        %v1908 = vld [vmem:[%s5 + $0x28] sm:$0xff]
        %v1909 = vld [vmem:[%s5 + $0x30] sm:$0xff]
        %v1910 = vld [vmem:[%s5 + $0x38] sm:$0xff]
        %v1911 = vld [vmem:[%s5 + $0x40] sm:$0xff]
        %v1912 = vld [vmem:[%s5 + $0x48] sm:$0xff]
        %v1913 = vld [vmem:[%s5 + $0x50] sm:$0xff]
        %v1914 = vld [vmem:[%s5 + $0x58] sm:$0xff]
        %v1915 = vld [vmem:[%s5 + $0x60] sm:$0xff]
        %v1916 = vld [vmem:[%s5 + $0x68] sm:$0xff]
        %v1917 = vld [vmem:[%s5 + $0x70] sm:$0xff]
        %v1918 = vld [vmem:[%s5 + $0x78] sm:$0xff]
        %v1919 = vld [vmem:[%s5 + $0x80] sm:$0xff]
        %v1920 = vld [vmem:[%s5 + $0x88] sm:$0xff]
        %v1921 = vld [vmem:[%s5 + $0x90] sm:$0xff]
        %v1922 = vld [vmem:[%s5 + $0x98] sm:$0xff]
        %v1923 = vld [vmem:[%s5 + $0xa0] sm:$0xff]
        %v1924 = vld [vmem:[%s5 + $0xa8] sm:$0xff]
        %v1925 = vld [vmem:[%s5 + $0xb0] sm:$0xff]
        %v1926 = vld [vmem:[%s5 + $0xb8] sm:$0xff]
        %v1927 = vld [vmem:[%s5 + $0xc0] sm:$0xff]
        %v1928 = vld [vmem:[%s5 + $0xc8] sm:$0xff]
        %v1929 = vld [vmem:[%s5 + $0xd0] sm:$0xff]
        %v1930 = vld [vmem:[%s5 + $0xd8] sm:$0xff]
        %v1931 = vld [vmem:[%s5 + $0xe0] sm:$0xff]
        %v1932 = vld [vmem:[%s5 + $0xe8] sm:$0xff]
        %v1933 = vld [vmem:[%s5 + $0xf0] sm:$0xff]
        %v1934 = vld [vmem:[%s5 + $0xf8] sm:$0xff]
        %v1935 = vld [vmem:[%s5 + $0x100] sm:$0xff]
        %v1936 = vld [vmem:[%s5 + $0x108] sm:$0xff]
        %v1937 = vld [vmem:[%s5 + $0x110] sm:$0xff]
        %v1938 = vld [vmem:[%s5 + $0x118] sm:$0xff]
        %v1939 = vld [vmem:[%s5 + $0x120] sm:$0xff]
        %v1940 = vld [vmem:[%s5 + $0x128] sm:$0xff]
        %v1941 = vld [vmem:[%s5 + $0x130] sm:$0xff]
        %v1942 = vld [vmem:[%s5 + $0x138] sm:$0xff]
        %v1943 = vld [vmem:[%s6] sm:$0x1]
        %v1945 = vperm.slane %v1902, 0
        %v1946 = vperm.slane %v1902, 1
        %v1947 = vperm.slane %v1902, 2
        %vm1950 = vcmask 523264
        %v1951 = vsel %vm1950, %v1947, 0
        %1953 = vmatpush.msra.mxu0 %v1918
        %1954 = vmatpush.msra.mxu0 %v1917
        %1955 = vmatpush.msra.mxu0 %v1916
        %1956 = vmatpush.msra.mxu0 %v1915
        %1957 = vmatpush.msra.mxu0 %v1914
        %1958 = vmatpush.msra.mxu0 %v1913
        %1959 = vmatpush.msra.mxu0 %v1912
        %1960 = vmatpush.msra.mxu0 %v1911
        %1961 = vmatpush.msra.mxu0 %v1910
        %1962 = vmatpush.msra.mxu0 %v1909
        %1963 = vmatpush.msra.mxu0 %v1908
        %1964 = vmatpush.msra.mxu0 %v1907
        %1965 = vmatpush.msra.mxu0 %v1906
        %1966 = vmatpush.msra.mxu0 %v1905
        %1967 = vmatpush.msra.mxu0 %v1904
        %1968 = vmatpush.msra.mxu0 %v1903
        %1969 = vmatmul.f32.gmra.mxu0 %v1945
        %v1970 = vpop.f32.mrf.mxu0
        %v1971 = vadd.f32 %v1943, %v1970
        %1972 = vdwg.mxu0
        %1973 = vmatpush.msra.mxu0 %v1934
        %1974 = vmatpush.msra.mxu0 %v1933
        %1975 = vmatpush.msra.mxu0 %v1932
        %1976 = vmatpush.msra.mxu0 %v1931
        %1977 = vmatpush.msra.mxu0 %v1930
        %1978 = vmatpush.msra.mxu0 %v1929
        %1979 = vmatpush.msra.mxu0 %v1928
        %1980 = vmatpush.msra.mxu0 %v1927
        %1981 = vmatpush.msra.mxu0 %v1926
        %1982 = vmatpush.msra.mxu0 %v1925
        %1983 = vmatpush.msra.mxu0 %v1924
        %1984 = vmatpush.msra.mxu0 %v1923
        %1985 = vmatpush.msra.mxu0 %v1922
        %1986 = vmatpush.msra.mxu0 %v1921
        %1987 = vmatpush.msra.mxu0 %v1920
        %1988 = vmatpush.msra.mxu0 %v1919
        %1989 = vmatmul.f32.gmra.mxu0 %v1946
        %v1990 = vpop.f32.mrf.mxu0
        %v1991 = vadd.f32 %v1971, %v1990
        %1992 = vdwg.mxu0
        %1993 = vmatpush.msra.mxu0 0.0
        %1994 = vmatpush.msra.mxu0 0.0
        %1995 = vmatpush.msra.mxu0 0.0
        %1996 = vmatpush.msra.mxu0 0.0
        %1997 = vmatpush.msra.mxu0 0.0
        %1998 = vmatpush.msra.mxu0 0.0
        %1999 = vmatpush.msra.mxu0 0.0
        %2000 = vmatpush.msra.mxu0 0.0
        %2001 = vmatpush.msra.mxu0 %v1942
        %2002 = vmatpush.msra.mxu0 %v1941
        %2003 = vmatpush.msra.mxu0 %v1940
        %2004 = vmatpush.msra.mxu0 %v1939
        %2005 = vmatpush.msra.mxu0 %v1938
        %2006 = vmatpush.msra.mxu0 %v1937
        %2007 = vmatpush.msra.mxu0 %v1936
        %2008 = vmatpush.msra.mxu0 %v1935
        %2009 = vmatmul.f32.gmra.mxu0 %v1951
        %v2010 = vpop.f32.mrf.mxu0
        %v2011 = vadd.f32 %v1991, %v2010
        %2012 = vdwg.mxu0
        %v2013 = vmax.f32 %v2011, 0.0
        %v2014 = vld [vmem:[%s7] sm:$0xff]
        %v2015 = vld [vmem:[%s7 + $0x8] sm:$0xff]
        %v2016 = vld [vmem:[%s7 + $0x10] sm:$0xff]
        %v2017 = vld [vmem:[%s7 + $0x18] sm:$0xff]
        %v2018 = vld [vmem:[%s7 + $0x20] sm:$0xff]
        %v2019 = vld [vmem:[%s7 + $0x28] sm:$0xff]
        %v2020 = vld [vmem:[%s7 + $0x30] sm:$0x3]
        %v2021 = vld [vmem:[%s8] sm:$0x1]
        %vm2022 = vcmask 408576
        %v2024 = vsel %vm2022, %v2013, 0
        %v2027 = vsel %vm1402, %v2020, 0
        %2029 = vmatpush.msra.mxu0 0.0
        %2030 = vmatpush.msra.mxu0 0.0
        %2031 = vmatpush.msra.mxu0 0.0
        %2032 = vmatpush.msra.mxu0 0.0
        %2033 = vmatpush.msra.mxu0 0.0
        %2034 = vmatpush.msra.mxu0 0.0
        %2035 = vmatpush.msra.mxu0 0.0
        %2036 = vmatpush.msra.mxu0 0.0
        %2037 = vmatpush.msra.mxu0 0.0
        %2038 = vmatpush.msra.mxu0 %v2027
        %2039 = vmatpush.msra.mxu0 %v2019
        %2040 = vmatpush.msra.mxu0 %v2018
        %2041 = vmatpush.msra.mxu0 %v2017
        %2042 = vmatpush.msra.mxu0 %v2016
        %2043 = vmatpush.msra.mxu0 %v2015
        %2044 = vmatpush.msra.mxu0 %v2014
        %2045 = vmatmul.f32.gmra.mxu0 %v2024
        %v2046 = vpop.f32.mrf.mxu0
        %v2047 = vadd.f32 %v2021, %v2046
        %2048 = vdwg.mxu0
        %vm2049 = vcmask 73728
        %v2050 = vsel %vm2049, %v2047, -inf
        %2051 = vmax.xlane.f32.xlu0 %v2050
        %v2052 = vpop.xlane.xlu0 %2051
        %v2053 = vsub.f32 %v2047, %v2052
        %v2054 = vmul.f32 %v2053, 1.442695
        %v2055 = vpow.pop %v2054
        %v2056 = vsel %vm2049, %v2055, 0.0
        %2057 = vadd.xlane.f32.xlu0 %v2056
        %v2058 = vpop.xlane.xlu0 %2057
        %v2059 = vlog2.pop %v2058
        %v2060 = vmul.f32 %v2059, 0.6931472
        %v2061 = vadd.f32 %v2060, %v2052
        %v2062 = vsub.f32 %v2047, %v2061
        %2063 = vst.msk [vmem:[%s324] sm:$0x1] %vm2049, %v2062
        %s2064 = sand.u32 %s225, 1
        %s2065 = scalar_lea.sflag [#allocation4], %s2064
        %s2066 = sand.u32 %s225, 1
        %s2067 = scalar_lea.vmem [#allocation3], %s2066
        // Predicated region
        $region57: #{convnet_forward.1} parent=55 // pred_check
          %p2068 = pneg %p235
        $region58: #{convnet_forward.1} parent=55 // pred_check_branch
          %2070 = sbr.rel (%p2068) target = $region60
        $region59: #{convnet_forward.1} parent=55 // pred_region
          %2072 = vsyncadd %s2065, 0
          %s2073 = scalar_lea.hbm %s9, %s23
          %s2075 = sshll.u32 %s2067, 4
          %s2076 = int_to_ptr.vmem [resolvable:$true] %s2075
          %s2077 = sshll.u32 %s2073, 4
          %s2078 = int_to_ptr.hbm [resolvable:$true] %s2077
          %2080 = dma.vmem_to_hbm [thread:$0]  %s2076, 16, %s2078, %s2065
        $region60: #{convnet_forward.1} parent=55 // pred_fallthru
          _
      $region56: #{convnet_forward.1} parent=5 // pred_fallthru
        _
      %p2081 = scmp.le.s32.totalorder 2, %s18
      // Predicated region
      $region61: #{convnet_forward.1} parent=5 // pred_check
        %p2082 = pneg %p2081
      $region62: #{convnet_forward.1} parent=5 // pred_check_branch
        %2084 = sbr.rel (%p2082) target = $region64
      $region63: #{convnet_forward.1} parent=5 // pred_region
        %s2085 = ssub.s32 %s18, 2
        // Predicated region
        $region65: #{convnet_forward.1} parent=63 // pred_check
          %p2086 = pneg %p241
        $region66: #{convnet_forward.1} parent=63 // pred_check_branch
          %2088 = sbr.rel (%p2086) target = $region68
        $region67: #{convnet_forward.1} parent=63 // pred_region
          %s2089 = sand.u32 %s226, 1
          %s2090 = scalar_lea.sflag [#allocation4], %s2089
          %s2091 = sand.u32 %s226, 1
          %s2092 = scalar_lea.vmem [#allocation3], %s2091
          %2094 = dma.done %s2090, 16
        $region68: #{convnet_forward.1} parent=63 // pred_fallthru
          _
      $region64: #{convnet_forward.1} parent=5 // pred_fallthru
        _
    $region6: #{convnet_forward.1} parent=1 // loop_footer
      %s22 = sadd.s32 1, %s18
    $region7: #{convnet_forward.1} parent=1 // loop_footer_branch
      %17 = sbr.rel target = $region3
    $region8: #{convnet_forward.1} parent=1 // loop_exit
      _
    %2095 = vsyncpa [#allocation4], 1
    %s2096 = scalar_lea.sflag [#allocation4], 1
    %2097 = vsyncpa %s2096, 1

</llo_original>
